<compile_context>
chip_gen: v5e
topology: v5e:2x2
jax: 0.10.0
libtpu: 0.0.40
codegen_flags: <defaults>
</compile_context>

<pallas_src>
import functools

import jax
import jax.numpy as jnp
from jax.experimental import pallas as pl
from jax.experimental.pallas import tpu as pltpu


def hanage_kernel(T, B, H,
                  x_ref, h0_ref, age_ref,
                  wih_ref, bih_ref, whh_ref, bhh_ref,
                  ws_f_ref, ws_b_ref, bsent_ref, wproj_ref,
                  wfin_f_ref, wfin_b_ref, wfin_age_ref, bfin_ref,
                  logp_ref, state_ref, attn_ref,
                  gi_scr, out_f_scr, out_b_scr):
    H2 = 2 * H

    # ---- fused input projection: all timesteps, BOTH directions, one matmul ------
    # x_ref row block t = [x(t) | x(T-1-t)]; columns are gate-grouped across dirs.
    # Written to scratch so the big gi tensor never pins vregs across the unrolled
    # recurrence (scales with T*B*6H).
    gi_scr[...] = (jnp.dot(x_ref[...], wih_ref[...],
                           preferred_element_type=jnp.float32) + bih_ref[...])

    # Hoist recurrent weights/biases out of the unrolled loop (one VMEM load each).
    whh = whh_ref[...]          # (2H, 6H) block-diagonal, gate-grouped columns
    bhh = bhh_ref[...]          # (1, 6H)

    # ---- fused bidirectional GRU recurrence (serial critical path) ----------------
    # One (B,2H)@(2H,6H) MXU matmul + one slab of gate math per step covers both the
    # fwd step (time t) and the bwd step (time T-1-t).
    h = h0_ref[...]             # (B, 2H) = [h_fwd | h_bwd]
    for t in range(T):
        gi = gi_scr[t * B:(t + 1) * B, :]                                # (B, 6H)
        gh = jnp.dot(h, whh, preferred_element_type=jnp.float32) + bhh   # (B, 6H)
        r = jax.nn.sigmoid(gi[:, 0:H2] + gh[:, 0:H2])                    # (B, 2H)
        z = jax.nn.sigmoid(gi[:, H2:2 * H2] + gh[:, H2:2 * H2])          # (B, 2H)
        n = jnp.tanh(gi[:, 2 * H2:3 * H2] + r * gh[:, 2 * H2:3 * H2])    # (B, 2H)
        h = (1.0 - z) * n + z * h
        # Stream outputs (off the dependence chain): fwd half is output for time t,
        # bwd half is output for time T-1-t.  Split scratches -> aligned row writes.
        out_f_scr[t * B:(t + 1) * B, :] = h[:, 0:H]
        out_b_scr[(T - 1 - t) * B:(T - t) * B, :] = h[:, H:H2]
    state_ref[0] = h[:, 0:H]
    state_ref[1] = h[:, H:H2]

    # ---- attention "squish" + projection over all timesteps (epilogue) -----------
    out_f = out_f_scr[...]                                               # (T*B, H)
    out_b = out_b_scr[...]                                               # (T*B, H)
    squish = jnp.tanh(
        jnp.dot(out_f, ws_f_ref[...], preferred_element_type=jnp.float32)
        + jnp.dot(out_b, ws_b_ref[...], preferred_element_type=jnp.float32)
        + bsent_ref[...])                                                # (T*B, 2H)

    # N=1 projection as VPU multiply + lane reduce (keeps the MXU off the epilogue).
    scores = jnp.sum(squish * wproj_ref[...], axis=1, keepdims=True)     # (T*B, 1)

    # Softmax over time per batch row, exact reciprocal. (T*B,1)->(T,B,1) is a
    # tile-aligned leading-dim split (B is one full sublane tile).
    scores = scores.reshape(T, B, 1)
    m = jnp.max(scores, axis=0, keepdims=True)
    e = jnp.exp(scores - m)
    attn = e / jnp.sum(e, axis=0, keepdims=True)                         # (T, B, 1)
    attn_ref[...] = attn

    # Attention-weighted sum of GRU outputs: one broadcast multiply + segmented
    # sublane reduce per direction (replaces the T-iteration ctx loop).
    attn_col = attn.reshape(T * B, 1)
    ctx_f = jnp.sum((out_f * attn_col).reshape(T, B, H), axis=0)         # (B, H)
    ctx_b = jnp.sum((out_b * attn_col).reshape(T, B, H), axis=0)         # (B, H)

    # Final linear on [ctx, age]: split matmul + rank-1 VPU FMA for the age column
    # (no width-1 lane concat, no odd K=2H+1 matmul), then exact log-softmax.
    logits = (jnp.dot(ctx_f, wfin_f_ref[...], preferred_element_type=jnp.float32)
              + jnp.dot(ctx_b, wfin_b_ref[...], preferred_element_type=jnp.float32)
              + age_ref[...] * wfin_age_ref[...]
              + bfin_ref[...])                                           # (B, C)
    mx = jnp.max(logits, axis=1, keepdims=True)
    lse = jnp.log(jnp.sum(jnp.exp(logits - mx), axis=1, keepdims=True)) + mx
    logp_ref[...] = logits - lse


def _build_fused_gru_weights(p, H, D):
    """Block-diagonal, gate-grouped GRU weights for the fused bidirectional step.

    Column order of the 6H axis is [r_f r_b | z_f z_b | n_f n_b] so each gate for
    both directions is one contiguous (B, 2H) slab in the kernel.
    """
    z_dh = jnp.zeros((D, H), jnp.float32)
    z_hh = jnp.zeros((H, H), jnp.float32)

    def gate(w, g):  # rows of a PyTorch (3H, K) weight for gate g in (r, z, n)
        return w[g * H:(g + 1) * H, :]

    ih_blocks, hh_blocks, bih_parts, bhh_parts = [], [], [], []
    for g in range(3):
        # input->hidden: rows 0:D multiply x(t) (fwd), rows D:2D multiply x(T-1-t) (bwd)
        fwd_col = jnp.concatenate([gate(p['w_ih_f'], g).T, z_dh], axis=0)   # (2D, H)
        bwd_col = jnp.concatenate([z_dh, gate(p['w_ih_b'], g).T], axis=0)   # (2D, H)
        ih_blocks.append(jnp.concatenate([fwd_col, bwd_col], axis=1))       # (2D, 2H)
        # hidden->hidden: rows 0:H multiply h_fwd, rows H:2H multiply h_bwd
        fwd_col = jnp.concatenate([gate(p['w_hh_f'], g).T, z_hh], axis=0)   # (2H, H)
        bwd_col = jnp.concatenate([z_hh, gate(p['w_hh_b'], g).T], axis=0)   # (2H, H)
        hh_blocks.append(jnp.concatenate([fwd_col, bwd_col], axis=1))       # (2H, 2H)
        bih_parts.append(jnp.concatenate([p['b_ih_f'][g * H:(g + 1) * H],
                                          p['b_ih_b'][g * H:(g + 1) * H]]))
        bhh_parts.append(jnp.concatenate([p['b_hh_f'][g * H:(g + 1) * H],
                                          p['b_hh_b'][g * H:(g + 1) * H]]))

    wih = jnp.concatenate(ih_blocks, axis=1)                # (2D, 6H)
    whh = jnp.concatenate(hh_blocks, axis=1)                # (2H, 6H)
    bih = jnp.concatenate(bih_parts).reshape(1, 6 * H)
    bhh = jnp.concatenate(bhh_parts).reshape(1, 6 * H)
    return wih, bih, whh, bhh


def attention_sent_rnn_forward(x, h0, age, p):
    """x: (T, B, 2*word_H), h0: (2, B, sent_H), age: (B,). Returns (logp, state, attn)."""
    T, B, D = x.shape
    H = h0.shape[2]
    C = p['w_fin'].shape[0]

    # Pad batch to a full sublane tile so every per-step slice / store is aligned.
    Bp = max(8, ((B + 7) // 8) * 8)
    pad = Bp - B
    xp = jnp.pad(x, ((0, 0), (0, pad), (0, 0)))
    h0p = jnp.pad(h0, ((0, 0), (0, pad), (0, 0)))
    agep = jnp.pad(age.reshape(-1, 1), ((0, pad), (0, 0)))

    # Fused-step input: row block t = [x(t) | x(T-1-t)] feeds fwd step t AND bwd
    # step T-1-t of the block-diagonal recurrence.
    x_cat = jnp.concatenate([xp, xp[::-1]], axis=-1).reshape(T * Bp, 2 * D)
    h0_cat = jnp.concatenate([h0p[0], h0p[1]], axis=1)                  # (Bp, 2H)

    wih, bih, whh, bhh = _build_fused_gru_weights(p, H, D)

    ws_f = p['w_sent'][0:H, :]                                           # (H, 2H)
    ws_b = p['w_sent'][H:2 * H, :]                                       # (H, 2H)
    bsent = p['b_sent'].reshape(1, 2 * H)
    wproj = p['w_proj'].reshape(1, 2 * H)
    wfin_t = p['w_fin'].T                                                # (2H+1, C)
    wfin_f = wfin_t[0:H, :]
    wfin_b = wfin_t[H:2 * H, :]
    wfin_age = wfin_t[2 * H:2 * H + 1, :]                                # (1, C)
    bfin = p['b_fin'].reshape(1, -1)

    kernel_args = (x_cat, h0_cat, agep,
                   wih, bih, whh, bhh,
                   ws_f, ws_b, bsent, wproj,
                   wfin_f, wfin_b, wfin_age, bfin)

    vmem = pl.BlockSpec(memory_space=pltpu.MemorySpace.VMEM)
    out_shapes = (
        jax.ShapeDtypeStruct((Bp, C), jnp.float32),       # log-softmax(final_map)
        jax.ShapeDtypeStruct((2, Bp, H), jnp.float32),    # state_sent
        jax.ShapeDtypeStruct((T, Bp, 1), jnp.float32),    # attention (t-major)
    )
    logp_p, state_p, attn_p = pl.pallas_call(
        functools.partial(hanage_kernel, T, Bp, H),
        out_shape=out_shapes,
        in_specs=[vmem] * len(kernel_args),
        out_specs=(vmem, vmem, vmem),
        scratch_shapes=[pltpu.VMEM((T * Bp, 6 * H), jnp.float32),   # fused gi
                        pltpu.VMEM((T * Bp, H), jnp.float32),       # fwd outputs
                        pltpu.VMEM((T * Bp, H), jnp.float32)],      # bwd outputs
    )(*kernel_args)

    # Slice the padded batch rows back out (padded rows carry garbage-but-finite
    # values); relayout the t-major attention to the module's (B, T) form.
    return logp_p[:B], state_p[:, :B, :], attn_p[:, :B, 0].T


def init_params(key, word_gru_hidden, sent_gru_hidden, n_classes):
    D_in = 2 * word_gru_hidden
    H = sent_gru_hidden
    keys = jax.random.split(key, 13)
    u = lambda k, shape, s=0.1: jax.random.uniform(k, shape, jnp.float32, -s, s)
    return {
        # bidirectional GRU(2*word_H -> sent_H): gates (r, z, n)
        'w_ih_f': u(keys[0], (3 * H, D_in)), 'w_hh_f': u(keys[1], (3 * H, H)),
        'b_ih_f': u(keys[2], (3 * H,)),      'b_hh_f': u(keys[3], (3 * H,)),
        'w_ih_b': u(keys[4], (3 * H, D_in)), 'w_hh_b': u(keys[5], (3 * H, H)),
        'b_ih_b': u(keys[6], (3 * H,)),      'b_hh_b': u(keys[7], (3 * H,)),
        # attention params
        'w_sent': u(keys[8], (2 * H, 2 * H)),
        'b_sent': u(keys[9], (2 * H, 1)),
        'w_proj': u(keys[10], (2 * H, 1)),
        # final linear over [2H features, age]
        'w_fin': u(keys[11], (n_classes, 2 * H + 1)),
        'b_fin': u(keys[12], (n_classes,)),
    }


def reference_forward(x, h0, age, p):
    """Pure-JAX mirror of the PyTorch forward for a numerical check."""
    T, B, _ = x.shape

    def cell(x_t, h, w_ih, w_hh, b_ih, b_hh):
        gi = x_t @ w_ih.T + b_ih
        gh = h @ w_hh.T + b_hh
        ir, iz, inn = jnp.split(gi, 3, axis=1)
        hr, hz, hn = jnp.split(gh, 3, axis=1)
        r = jax.nn.sigmoid(ir + hr)
        z = jax.nn.sigmoid(iz + hz)
        n = jnp.tanh(inn + r * hn)
        return (1.0 - z) * n + z * h

    h = h0[0]; fwd = []
    for t in range(T):
        h = cell(x[t], h, p['w_ih_f'], p['w_hh_f'], p['b_ih_f'], p['b_hh_f'])
        fwd.append(h)
    hf = h
    h = h0[1]; bwd = [None] * T
    for t in range(T - 1, -1, -1):
        h = cell(x[t], h, p['w_ih_b'], p['w_hh_b'], p['b_ih_b'], p['b_hh_b'])
        bwd[t] = h
    hb = h
    out = jnp.stack([jnp.concatenate([fwd[t], bwd[t]], -1) for t in range(T)], 0)
    squish = jnp.tanh(out @ p['w_sent'] + p['b_sent'][:, 0])
    attn_logits = (squish @ p['w_proj'])[..., 0]              # (T, B)
    attn = jax.nn.softmax(attn_logits, axis=0)                # softmax over seq (legacy dim=1 on (B,T))
    ctx = jnp.sum(attn[:, :, None] * out, axis=0)             # (B, 2H)
    feat = jnp.concatenate([ctx, age.reshape(-1, 1)], axis=1)
    logits = feat @ p['w_fin'].T + p['b_fin']
    return jax.nn.log_softmax(logits, axis=1), jnp.stack([hf, hb], 0), attn.T


if __name__ == "__main__":
    T, B = 8, 4
    word_gru_hidden = 32
    sent_gru_hidden = 32
    n_classes = 5

    key = jax.random.PRNGKey(0)
    kx, kh, ka, kp = jax.random.split(key, 4)
    x = jax.random.normal(kx, (T, B, 2 * word_gru_hidden), jnp.float32)
    h0 = 0.1 * jax.random.normal(kh, (2, B, sent_gru_hidden), jnp.float32)
    age = jax.random.uniform(ka, (B,), jnp.float32, 0.2, 1.0)
    params = init_params(kp, word_gru_hidden, sent_gru_hidden, n_classes)

    logp, state_out, attn = attention_sent_rnn_forward(x, h0, age, params)
    jax.block_until_ready((logp, state_out, attn))

    logp_r, state_r, attn_r = reference_forward(x, h0, age, params)
    assert jnp.allclose(logp, logp_r, atol=1e-3, rtol=1e-3)
    assert jnp.allclose(state_out, state_r, atol=1e-3, rtol=1e-3)
    assert jnp.allclose(attn, attn_r, atol=1e-3, rtol=1e-3)

    print("KERNEL_OK")
</pallas_src>

<mosaic_0001>
module attributes {stable_mosaic.version = 11 : i64} {
  func.func @hanage_kernel(%arg0: memref<64x128xf32, #tpu.memory_space<vmem>>, %arg1: memref<8x64xf32, #tpu.memory_space<vmem>>, %arg2: memref<8x1xf32, #tpu.memory_space<vmem>>, %arg3: memref<128x192xf32, #tpu.memory_space<vmem>>, %arg4: memref<1x192xf32, #tpu.memory_space<vmem>>, %arg5: memref<64x192xf32, #tpu.memory_space<vmem>>, %arg6: memref<1x192xf32, #tpu.memory_space<vmem>>, %arg7: memref<32x64xf32, #tpu.memory_space<vmem>>, %arg8: memref<32x64xf32, #tpu.memory_space<vmem>>, %arg9: memref<1x64xf32, #tpu.memory_space<vmem>>, %arg10: memref<1x64xf32, #tpu.memory_space<vmem>>, %arg11: memref<32x5xf32, #tpu.memory_space<vmem>>, %arg12: memref<32x5xf32, #tpu.memory_space<vmem>>, %arg13: memref<1x5xf32, #tpu.memory_space<vmem>>, %arg14: memref<1x5xf32, #tpu.memory_space<vmem>>, %arg15: memref<8x5xf32, #tpu.memory_space<vmem>>, %arg16: memref<2x8x32xf32, #tpu.memory_space<vmem>>, %arg17: memref<8x8x1xf32, #tpu.memory_space<vmem>>, %arg18: memref<64x192xf32, #tpu.memory_space<vmem>>, %arg19: memref<64x32xf32, #tpu.memory_space<vmem>>, %arg20: memref<64x32xf32, #tpu.memory_space<vmem>>) attributes {dimension_semantics = [], scalar_prefetch = 0 : i64, scratch_operands = 3 : i64, tpu.core_type = #tpu.core_type<tc>} {
    %c0 = arith.constant 0 : index
    %c0_0 = arith.constant 0 : index
    %0 = vector.load %arg0[%c0, %c0_0] : memref<64x128xf32, #tpu.memory_space<vmem>>, vector<64x128xf32>
    %c0_1 = arith.constant 0 : index
    %c0_2 = arith.constant 0 : index
    %1 = vector.load %arg3[%c0_1, %c0_2] : memref<128x192xf32, #tpu.memory_space<vmem>>, vector<128x192xf32>
    %cst = arith.constant dense<0.000000e+00> : vector<64x192xf32>
    %2 = tpu.matmul %0, %1, %cst {dimension_numbers = #tpu.dot_dimension_numbers<[1], [0], [0], [1], [0, 0, 1, 1], [], []>} : vector<64x128xf32>, vector<128x192xf32>, vector<64x192xf32> -> vector<64x192xf32>
    %c0_3 = arith.constant 0 : index
    %c0_4 = arith.constant 0 : index
    %3 = vector.load %arg4[%c0_3, %c0_4] : memref<1x192xf32, #tpu.memory_space<vmem>>, vector<1x192xf32>
    %4 = vector.broadcast %3 : vector<1x192xf32> to vector<64x192xf32>
    %5 = arith.addf %2, %4 : vector<64x192xf32>
    %c0_5 = arith.constant 0 : index
    %c0_6 = arith.constant 0 : index
    %6 = vector.load %arg18[%c0_5, %c0_6] : memref<64x192xf32, #tpu.memory_space<vmem>>, vector<64x192xf32>
    tpu.vector_store %arg18[%c0_5, %c0_6], %5 {strides = array<i32>} : memref<64x192xf32, #tpu.memory_space<vmem>>, vector<64x192xf32>,
    %c0_7 = arith.constant 0 : index
    %c0_8 = arith.constant 0 : index
    %7 = vector.load %arg5[%c0_7, %c0_8] : memref<64x192xf32, #tpu.memory_space<vmem>>, vector<64x192xf32>
    %c0_9 = arith.constant 0 : index
    %c0_10 = arith.constant 0 : index
    %8 = vector.load %arg6[%c0_9, %c0_10] : memref<1x192xf32, #tpu.memory_space<vmem>>, vector<1x192xf32>
    %c0_11 = arith.constant 0 : index
    %c0_12 = arith.constant 0 : index
    %9 = vector.load %arg1[%c0_11, %c0_12] : memref<8x64xf32, #tpu.memory_space<vmem>>, vector<8x64xf32>
    %c0_13 = arith.constant 0 : index
    %c0_14 = arith.constant 0 : index
    %10 = vector.load %arg18[%c0_13, %c0_14] : memref<64x192xf32, #tpu.memory_space<vmem>>, vector<8x192xf32>
    %cst_15 = arith.constant dense<0.000000e+00> : vector<8x192xf32>
    %11 = tpu.matmul %9, %7, %cst_15 {dimension_numbers = #tpu.dot_dimension_numbers<[1], [0], [0], [1], [0, 0, 1, 1], [], []>} : vector<8x64xf32>, vector<64x192xf32>, vector<8x192xf32> -> vector<8x192xf32>
    %12 = vector.broadcast %8 : vector<1x192xf32> to vector<8x192xf32>
    %13 = arith.addf %11, %12 : vector<8x192xf32>
    %14 = vector.extract_strided_slice %10 {offsets = [0, 0], sizes = [8, 64], strides = [1, 1]} : vector<8x192xf32> to vector<8x64xf32>
    %15 = vector.extract_strided_slice %13 {offsets = [0, 0], sizes = [8, 64], strides = [1, 1]} : vector<8x192xf32> to vector<8x64xf32>
    %16 = arith.addf %14, %15 : vector<8x64xf32>
    %17 = arith.negf %16 : vector<8x64xf32>
    %18 = math.exp %17 : vector<8x64xf32>
    %cst_16 = arith.constant 1.000000e+00 : f32
    %19 = vector.broadcast %cst_16 : f32 to vector<8x64xf32>
    %20 = arith.addf %19, %18 : vector<8x64xf32>
    %21 = arith.divf %19, %20 : vector<8x64xf32>
    %22 = vector.extract_strided_slice %10 {offsets = [0, 64], sizes = [8, 64], strides = [1, 1]} : vector<8x192xf32> to vector<8x64xf32>
    %23 = vector.extract_strided_slice %13 {offsets = [0, 64], sizes = [8, 64], strides = [1, 1]} : vector<8x192xf32> to vector<8x64xf32>
    %24 = arith.addf %22, %23 : vector<8x64xf32>
    %25 = arith.negf %24 : vector<8x64xf32>
    %26 = math.exp %25 : vector<8x64xf32>
    %cst_17 = arith.constant 1.000000e+00 : f32
    %27 = vector.broadcast %cst_17 : f32 to vector<8x64xf32>
    %28 = arith.addf %27, %26 : vector<8x64xf32>
    %29 = arith.divf %27, %28 : vector<8x64xf32>
    %30 = vector.extract_strided_slice %10 {offsets = [0, 128], sizes = [8, 64], strides = [1, 1]} : vector<8x192xf32> to vector<8x64xf32>
    %31 = vector.extract_strided_slice %13 {offsets = [0, 128], sizes = [8, 64], strides = [1, 1]} : vector<8x192xf32> to vector<8x64xf32>
    %32 = arith.mulf %21, %31 : vector<8x64xf32>
    %33 = arith.addf %30, %32 : vector<8x64xf32>
    %34 = math.tanh %33 : vector<8x64xf32>
    %cst_18 = arith.constant 1.000000e+00 : f32
    %35 = vector.broadcast %cst_18 : f32 to vector<8x64xf32>
    %36 = arith.subf %35, %29 : vector<8x64xf32>
    %37 = arith.mulf %36, %34 : vector<8x64xf32>
    %38 = arith.mulf %29, %9 : vector<8x64xf32>
    %39 = arith.addf %37, %38 : vector<8x64xf32>
    %40 = vector.extract_strided_slice %39 {offsets = [0, 0], sizes = [8, 32], strides = [1, 1]} : vector<8x64xf32> to vector<8x32xf32>
    %c0_19 = arith.constant 0 : index
    %c0_20 = arith.constant 0 : index
    %41 = vector.load %arg19[%c0_19, %c0_20] : memref<64x32xf32, #tpu.memory_space<vmem>>, vector<8x32xf32>
    tpu.vector_store %arg19[%c0_19, %c0_20], %40 {strides = array<i32>} : memref<64x32xf32, #tpu.memory_space<vmem>>, vector<8x32xf32>,
    %42 = vector.extract_strided_slice %39 {offsets = [0, 32], sizes = [8, 32], strides = [1, 1]} : vector<8x64xf32> to vector<8x32xf32>
    %c56 = arith.constant 56 : index
    %c0_21 = arith.constant 0 : index
    %43 = vector.load %arg20[%c56, %c0_21] : memref<64x32xf32, #tpu.memory_space<vmem>>, vector<8x32xf32>
    tpu.vector_store %arg20[%c56, %c0_21], %42 {strides = array<i32>} : memref<64x32xf32, #tpu.memory_space<vmem>>, vector<8x32xf32>,
    %c8 = arith.constant 8 : index
    %c0_22 = arith.constant 0 : index
    %44 = vector.load %arg18[%c8, %c0_22] : memref<64x192xf32, #tpu.memory_space<vmem>>, vector<8x192xf32>
    %cst_23 = arith.constant dense<0.000000e+00> : vector<8x192xf32>
    %45 = tpu.matmul %39, %7, %cst_23 {dimension_numbers = #tpu.dot_dimension_numbers<[1], [0], [0], [1], [0, 0, 1, 1], [], []>} : vector<8x64xf32>, vector<64x192xf32>, vector<8x192xf32> -> vector<8x192xf32>
    %46 = vector.broadcast %8 : vector<1x192xf32> to vector<8x192xf32>
    %47 = arith.addf %45, %46 : vector<8x192xf32>
    %48 = vector.extract_strided_slice %44 {offsets = [0, 0], sizes = [8, 64], strides = [1, 1]} : vector<8x192xf32> to vector<8x64xf32>
    %49 = vector.extract_strided_slice %47 {offsets = [0, 0], sizes = [8, 64], strides = [1, 1]} : vector<8x192xf32> to vector<8x64xf32>
    %50 = arith.addf %48, %49 : vector<8x64xf32>
    %51 = arith.negf %50 : vector<8x64xf32>
    %52 = math.exp %51 : vector<8x64xf32>
    %cst_24 = arith.constant 1.000000e+00 : f32
    %53 = vector.broadcast %cst_24 : f32 to vector<8x64xf32>
    %54 = arith.addf %53, %52 : vector<8x64xf32>
    %55 = arith.divf %53, %54 : vector<8x64xf32>
    %56 = vector.extract_strided_slice %44 {offsets = [0, 64], sizes = [8, 64], strides = [1, 1]} : vector<8x192xf32> to vector<8x64xf32>
    %57 = vector.extract_strided_slice %47 {offsets = [0, 64], sizes = [8, 64], strides = [1, 1]} : vector<8x192xf32> to vector<8x64xf32>
    %58 = arith.addf %56, %57 : vector<8x64xf32>
    %59 = arith.negf %58 : vector<8x64xf32>
    %60 = math.exp %59 : vector<8x64xf32>
    %cst_25 = arith.constant 1.000000e+00 : f32
    %61 = vector.broadcast %cst_25 : f32 to vector<8x64xf32>
    %62 = arith.addf %61, %60 : vector<8x64xf32>
    %63 = arith.divf %61, %62 : vector<8x64xf32>
    %64 = vector.extract_strided_slice %44 {offsets = [0, 128], sizes = [8, 64], strides = [1, 1]} : vector<8x192xf32> to vector<8x64xf32>
    %65 = vector.extract_strided_slice %47 {offsets = [0, 128], sizes = [8, 64], strides = [1, 1]} : vector<8x192xf32> to vector<8x64xf32>
    %66 = arith.mulf %55, %65 : vector<8x64xf32>
    %67 = arith.addf %64, %66 : vector<8x64xf32>
    %68 = math.tanh %67 : vector<8x64xf32>
    %cst_26 = arith.constant 1.000000e+00 : f32
    %69 = vector.broadcast %cst_26 : f32 to vector<8x64xf32>
    %70 = arith.subf %69, %63 : vector<8x64xf32>
    %71 = arith.mulf %70, %68 : vector<8x64xf32>
    %72 = arith.mulf %63, %39 : vector<8x64xf32>
    %73 = arith.addf %71, %72 : vector<8x64xf32>
    %74 = vector.extract_strided_slice %73 {offsets = [0, 0], sizes = [8, 32], strides = [1, 1]} : vector<8x64xf32> to vector<8x32xf32>
    %c8_27 = arith.constant 8 : index
    %c0_28 = arith.constant 0 : index
    %75 = vector.load %arg19[%c8_27, %c0_28] : memref<64x32xf32, #tpu.memory_space<vmem>>, vector<8x32xf32>
    tpu.vector_store %arg19[%c8_27, %c0_28], %74 {strides = array<i32>} : memref<64x32xf32, #tpu.memory_space<vmem>>, vector<8x32xf32>,
    %76 = vector.extract_strided_slice %73 {offsets = [0, 32], sizes = [8, 32], strides = [1, 1]} : vector<8x64xf32> to vector<8x32xf32>
    %c48 = arith.constant 48 : index
    %c0_29 = arith.constant 0 : index
    %77 = vector.load %arg20[%c48, %c0_29] : memref<64x32xf32, #tpu.memory_space<vmem>>, vector<8x32xf32>
    tpu.vector_store %arg20[%c48, %c0_29], %76 {strides = array<i32>} : memref<64x32xf32, #tpu.memory_space<vmem>>, vector<8x32xf32>,
    %c16 = arith.constant 16 : index
    %c0_30 = arith.constant 0 : index
    %78 = vector.load %arg18[%c16, %c0_30] : memref<64x192xf32, #tpu.memory_space<vmem>>, vector<8x192xf32>
    %cst_31 = arith.constant dense<0.000000e+00> : vector<8x192xf32>
    %79 = tpu.matmul %73, %7, %cst_31 {dimension_numbers = #tpu.dot_dimension_numbers<[1], [0], [0], [1], [0, 0, 1, 1], [], []>} : vector<8x64xf32>, vector<64x192xf32>, vector<8x192xf32> -> vector<8x192xf32>
    %80 = vector.broadcast %8 : vector<1x192xf32> to vector<8x192xf32>
    %81 = arith.addf %79, %80 : vector<8x192xf32>
    %82 = vector.extract_strided_slice %78 {offsets = [0, 0], sizes = [8, 64], strides = [1, 1]} : vector<8x192xf32> to vector<8x64xf32>
    %83 = vector.extract_strided_slice %81 {offsets = [0, 0], sizes = [8, 64], strides = [1, 1]} : vector<8x192xf32> to vector<8x64xf32>
    %84 = arith.addf %82, %83 : vector<8x64xf32>
    %85 = arith.negf %84 : vector<8x64xf32>
    %86 = math.exp %85 : vector<8x64xf32>
    %cst_32 = arith.constant 1.000000e+00 : f32
    %87 = vector.broadcast %cst_32 : f32 to vector<8x64xf32>
    %88 = arith.addf %87, %86 : vector<8x64xf32>
    %89 = arith.divf %87, %88 : vector<8x64xf32>
    %90 = vector.extract_strided_slice %78 {offsets = [0, 64], sizes = [8, 64], strides = [1, 1]} : vector<8x192xf32> to vector<8x64xf32>
    %91 = vector.extract_strided_slice %81 {offsets = [0, 64], sizes = [8, 64], strides = [1, 1]} : vector<8x192xf32> to vector<8x64xf32>
    %92 = arith.addf %90, %91 : vector<8x64xf32>
    %93 = arith.negf %92 : vector<8x64xf32>
    %94 = math.exp %93 : vector<8x64xf32>
    %cst_33 = arith.constant 1.000000e+00 : f32
    %95 = vector.broadcast %cst_33 : f32 to vector<8x64xf32>
    %96 = arith.addf %95, %94 : vector<8x64xf32>
    %97 = arith.divf %95, %96 : vector<8x64xf32>
    %98 = vector.extract_strided_slice %78 {offsets = [0, 128], sizes = [8, 64], strides = [1, 1]} : vector<8x192xf32> to vector<8x64xf32>
    %99 = vector.extract_strided_slice %81 {offsets = [0, 128], sizes = [8, 64], strides = [1, 1]} : vector<8x192xf32> to vector<8x64xf32>
    %100 = arith.mulf %89, %99 : vector<8x64xf32>
    %101 = arith.addf %98, %100 : vector<8x64xf32>
    %102 = math.tanh %101 : vector<8x64xf32>
    %cst_34 = arith.constant 1.000000e+00 : f32
    %103 = vector.broadcast %cst_34 : f32 to vector<8x64xf32>
    %104 = arith.subf %103, %97 : vector<8x64xf32>
    %105 = arith.mulf %104, %102 : vector<8x64xf32>
    %106 = arith.mulf %97, %73 : vector<8x64xf32>
    %107 = arith.addf %105, %106 : vector<8x64xf32>
    %108 = vector.extract_strided_slice %107 {offsets = [0, 0], sizes = [8, 32], strides = [1, 1]} : vector<8x64xf32> to vector<8x32xf32>
    %c16_35 = arith.constant 16 : index
    %c0_36 = arith.constant 0 : index
    %109 = vector.load %arg19[%c16_35, %c0_36] : memref<64x32xf32, #tpu.memory_space<vmem>>, vector<8x32xf32>
    tpu.vector_store %arg19[%c16_35, %c0_36], %108 {strides = array<i32>} : memref<64x32xf32, #tpu.memory_space<vmem>>, vector<8x32xf32>,
    %110 = vector.extract_strided_slice %107 {offsets = [0, 32], sizes = [8, 32], strides = [1, 1]} : vector<8x64xf32> to vector<8x32xf32>
    %c40 = arith.constant 40 : index
    %c0_37 = arith.constant 0 : index
    %111 = vector.load %arg20[%c40, %c0_37] : memref<64x32xf32, #tpu.memory_space<vmem>>, vector<8x32xf32>
    tpu.vector_store %arg20[%c40, %c0_37], %110 {strides = array<i32>} : memref<64x32xf32, #tpu.memory_space<vmem>>, vector<8x32xf32>,
    %c24 = arith.constant 24 : index
    %c0_38 = arith.constant 0 : index
    %112 = vector.load %arg18[%c24, %c0_38] : memref<64x192xf32, #tpu.memory_space<vmem>>, vector<8x192xf32>
    %cst_39 = arith.constant dense<0.000000e+00> : vector<8x192xf32>
    %113 = tpu.matmul %107, %7, %cst_39 {dimension_numbers = #tpu.dot_dimension_numbers<[1], [0], [0], [1], [0, 0, 1, 1], [], []>} : vector<8x64xf32>, vector<64x192xf32>, vector<8x192xf32> -> vector<8x192xf32>
    %114 = vector.broadcast %8 : vector<1x192xf32> to vector<8x192xf32>
    %115 = arith.addf %113, %114 : vector<8x192xf32>
    %116 = vector.extract_strided_slice %112 {offsets = [0, 0], sizes = [8, 64], strides = [1, 1]} : vector<8x192xf32> to vector<8x64xf32>
    %117 = vector.extract_strided_slice %115 {offsets = [0, 0], sizes = [8, 64], strides = [1, 1]} : vector<8x192xf32> to vector<8x64xf32>
    %118 = arith.addf %116, %117 : vector<8x64xf32>
    %119 = arith.negf %118 : vector<8x64xf32>
    %120 = math.exp %119 : vector<8x64xf32>
    %cst_40 = arith.constant 1.000000e+00 : f32
    %121 = vector.broadcast %cst_40 : f32 to vector<8x64xf32>
    %122 = arith.addf %121, %120 : vector<8x64xf32>
    %123 = arith.divf %121, %122 : vector<8x64xf32>
    %124 = vector.extract_strided_slice %112 {offsets = [0, 64], sizes = [8, 64], strides = [1, 1]} : vector<8x192xf32> to vector<8x64xf32>
    %125 = vector.extract_strided_slice %115 {offsets = [0, 64], sizes = [8, 64], strides = [1, 1]} : vector<8x192xf32> to vector<8x64xf32>
    %126 = arith.addf %124, %125 : vector<8x64xf32>
    %127 = arith.negf %126 : vector<8x64xf32>
    %128 = math.exp %127 : vector<8x64xf32>
    %cst_41 = arith.constant 1.000000e+00 : f32
    %129 = vector.broadcast %cst_41 : f32 to vector<8x64xf32>
    %130 = arith.addf %129, %128 : vector<8x64xf32>
    %131 = arith.divf %129, %130 : vector<8x64xf32>
    %132 = vector.extract_strided_slice %112 {offsets = [0, 128], sizes = [8, 64], strides = [1, 1]} : vector<8x192xf32> to vector<8x64xf32>
    %133 = vector.extract_strided_slice %115 {offsets = [0, 128], sizes = [8, 64], strides = [1, 1]} : vector<8x192xf32> to vector<8x64xf32>
    %134 = arith.mulf %123, %133 : vector<8x64xf32>
    %135 = arith.addf %132, %134 : vector<8x64xf32>
    %136 = math.tanh %135 : vector<8x64xf32>
    %cst_42 = arith.constant 1.000000e+00 : f32
    %137 = vector.broadcast %cst_42 : f32 to vector<8x64xf32>
    %138 = arith.subf %137, %131 : vector<8x64xf32>
    %139 = arith.mulf %138, %136 : vector<8x64xf32>
    %140 = arith.mulf %131, %107 : vector<8x64xf32>
    %141 = arith.addf %139, %140 : vector<8x64xf32>
    %142 = vector.extract_strided_slice %141 {offsets = [0, 0], sizes = [8, 32], strides = [1, 1]} : vector<8x64xf32> to vector<8x32xf32>
    %c24_43 = arith.constant 24 : index
    %c0_44 = arith.constant 0 : index
    %143 = vector.load %arg19[%c24_43, %c0_44] : memref<64x32xf32, #tpu.memory_space<vmem>>, vector<8x32xf32>
    tpu.vector_store %arg19[%c24_43, %c0_44], %142 {strides = array<i32>} : memref<64x32xf32, #tpu.memory_space<vmem>>, vector<8x32xf32>,
    %144 = vector.extract_strided_slice %141 {offsets = [0, 32], sizes = [8, 32], strides = [1, 1]} : vector<8x64xf32> to vector<8x32xf32>
    %c32 = arith.constant 32 : index
    %c0_45 = arith.constant 0 : index
    %145 = vector.load %arg20[%c32, %c0_45] : memref<64x32xf32, #tpu.memory_space<vmem>>, vector<8x32xf32>
    tpu.vector_store %arg20[%c32, %c0_45], %144 {strides = array<i32>} : memref<64x32xf32, #tpu.memory_space<vmem>>, vector<8x32xf32>,
    %c32_46 = arith.constant 32 : index
    %c0_47 = arith.constant 0 : index
    %146 = vector.load %arg18[%c32_46, %c0_47] : memref<64x192xf32, #tpu.memory_space<vmem>>, vector<8x192xf32>
    %cst_48 = arith.constant dense<0.000000e+00> : vector<8x192xf32>
    %147 = tpu.matmul %141, %7, %cst_48 {dimension_numbers = #tpu.dot_dimension_numbers<[1], [0], [0], [1], [0, 0, 1, 1], [], []>} : vector<8x64xf32>, vector<64x192xf32>, vector<8x192xf32> -> vector<8x192xf32>
    %148 = vector.broadcast %8 : vector<1x192xf32> to vector<8x192xf32>
    %149 = arith.addf %147, %148 : vector<8x192xf32>
    %150 = vector.extract_strided_slice %146 {offsets = [0, 0], sizes = [8, 64], strides = [1, 1]} : vector<8x192xf32> to vector<8x64xf32>
    %151 = vector.extract_strided_slice %149 {offsets = [0, 0], sizes = [8, 64], strides = [1, 1]} : vector<8x192xf32> to vector<8x64xf32>
    %152 = arith.addf %150, %151 : vector<8x64xf32>
    %153 = arith.negf %152 : vector<8x64xf32>
    %154 = math.exp %153 : vector<8x64xf32>
    %cst_49 = arith.constant 1.000000e+00 : f32
    %155 = vector.broadcast %cst_49 : f32 to vector<8x64xf32>
    %156 = arith.addf %155, %154 : vector<8x64xf32>
    %157 = arith.divf %155, %156 : vector<8x64xf32>
    %158 = vector.extract_strided_slice %146 {offsets = [0, 64], sizes = [8, 64], strides = [1, 1]} : vector<8x192xf32> to vector<8x64xf32>
    %159 = vector.extract_strided_slice %149 {offsets = [0, 64], sizes = [8, 64], strides = [1, 1]} : vector<8x192xf32> to vector<8x64xf32>
    %160 = arith.addf %158, %159 : vector<8x64xf32>
    %161 = arith.negf %160 : vector<8x64xf32>
    %162 = math.exp %161 : vector<8x64xf32>
    %cst_50 = arith.constant 1.000000e+00 : f32
    %163 = vector.broadcast %cst_50 : f32 to vector<8x64xf32>
    %164 = arith.addf %163, %162 : vector<8x64xf32>
    %165 = arith.divf %163, %164 : vector<8x64xf32>
    %166 = vector.extract_strided_slice %146 {offsets = [0, 128], sizes = [8, 64], strides = [1, 1]} : vector<8x192xf32> to vector<8x64xf32>
    %167 = vector.extract_strided_slice %149 {offsets = [0, 128], sizes = [8, 64], strides = [1, 1]} : vector<8x192xf32> to vector<8x64xf32>
    %168 = arith.mulf %157, %167 : vector<8x64xf32>
    %169 = arith.addf %166, %168 : vector<8x64xf32>
    %170 = math.tanh %169 : vector<8x64xf32>
    %cst_51 = arith.constant 1.000000e+00 : f32
    %171 = vector.broadcast %cst_51 : f32 to vector<8x64xf32>
    %172 = arith.subf %171, %165 : vector<8x64xf32>
    %173 = arith.mulf %172, %170 : vector<8x64xf32>
    %174 = arith.mulf %165, %141 : vector<8x64xf32>
    %175 = arith.addf %173, %174 : vector<8x64xf32>
    %176 = vector.extract_strided_slice %175 {offsets = [0, 0], sizes = [8, 32], strides = [1, 1]} : vector<8x64xf32> to vector<8x32xf32>
    %c32_52 = arith.constant 32 : index
    %c0_53 = arith.constant 0 : index
    %177 = vector.load %arg19[%c32_52, %c0_53] : memref<64x32xf32, #tpu.memory_space<vmem>>, vector<8x32xf32>
    tpu.vector_store %arg19[%c32_52, %c0_53], %176 {strides = array<i32>} : memref<64x32xf32, #tpu.memory_space<vmem>>, vector<8x32xf32>,
    %178 = vector.extract_strided_slice %175 {offsets = [0, 32], sizes = [8, 32], strides = [1, 1]} : vector<8x64xf32> to vector<8x32xf32>
    %c24_54 = arith.constant 24 : index
    %c0_55 = arith.constant 0 : index
    %179 = vector.load %arg20[%c24_54, %c0_55] : memref<64x32xf32, #tpu.memory_space<vmem>>, vector<8x32xf32>
    tpu.vector_store %arg20[%c24_54, %c0_55], %178 {strides = array<i32>} : memref<64x32xf32, #tpu.memory_space<vmem>>, vector<8x32xf32>,
    %c40_56 = arith.constant 40 : index
    %c0_57 = arith.constant 0 : index
    %180 = vector.load %arg18[%c40_56, %c0_57] : memref<64x192xf32, #tpu.memory_space<vmem>>, vector<8x192xf32>
    %cst_58 = arith.constant dense<0.000000e+00> : vector<8x192xf32>
    %181 = tpu.matmul %175, %7, %cst_58 {dimension_numbers = #tpu.dot_dimension_numbers<[1], [0], [0], [1], [0, 0, 1, 1], [], []>} : vector<8x64xf32>, vector<64x192xf32>, vector<8x192xf32> -> vector<8x192xf32>
    %182 = vector.broadcast %8 : vector<1x192xf32> to vector<8x192xf32>
    %183 = arith.addf %181, %182 : vector<8x192xf32>
    %184 = vector.extract_strided_slice %180 {offsets = [0, 0], sizes = [8, 64], strides = [1, 1]} : vector<8x192xf32> to vector<8x64xf32>
    %185 = vector.extract_strided_slice %183 {offsets = [0, 0], sizes = [8, 64], strides = [1, 1]} : vector<8x192xf32> to vector<8x64xf32>
    %186 = arith.addf %184, %185 : vector<8x64xf32>
    %187 = arith.negf %186 : vector<8x64xf32>
    %188 = math.exp %187 : vector<8x64xf32>
    %cst_59 = arith.constant 1.000000e+00 : f32
    %189 = vector.broadcast %cst_59 : f32 to vector<8x64xf32>
    %190 = arith.addf %189, %188 : vector<8x64xf32>
    %191 = arith.divf %189, %190 : vector<8x64xf32>
    %192 = vector.extract_strided_slice %180 {offsets = [0, 64], sizes = [8, 64], strides = [1, 1]} : vector<8x192xf32> to vector<8x64xf32>
    %193 = vector.extract_strided_slice %183 {offsets = [0, 64], sizes = [8, 64], strides = [1, 1]} : vector<8x192xf32> to vector<8x64xf32>
    %194 = arith.addf %192, %193 : vector<8x64xf32>
    %195 = arith.negf %194 : vector<8x64xf32>
    %196 = math.exp %195 : vector<8x64xf32>
    %cst_60 = arith.constant 1.000000e+00 : f32
    %197 = vector.broadcast %cst_60 : f32 to vector<8x64xf32>
    %198 = arith.addf %197, %196 : vector<8x64xf32>
    %199 = arith.divf %197, %198 : vector<8x64xf32>
    %200 = vector.extract_strided_slice %180 {offsets = [0, 128], sizes = [8, 64], strides = [1, 1]} : vector<8x192xf32> to vector<8x64xf32>
    %201 = vector.extract_strided_slice %183 {offsets = [0, 128], sizes = [8, 64], strides = [1, 1]} : vector<8x192xf32> to vector<8x64xf32>
    %202 = arith.mulf %191, %201 : vector<8x64xf32>
    %203 = arith.addf %200, %202 : vector<8x64xf32>
    %204 = math.tanh %203 : vector<8x64xf32>
    %cst_61 = arith.constant 1.000000e+00 : f32
    %205 = vector.broadcast %cst_61 : f32 to vector<8x64xf32>
    %206 = arith.subf %205, %199 : vector<8x64xf32>
    %207 = arith.mulf %206, %204 : vector<8x64xf32>
    %208 = arith.mulf %199, %175 : vector<8x64xf32>
    %209 = arith.addf %207, %208 : vector<8x64xf32>
    %210 = vector.extract_strided_slice %209 {offsets = [0, 0], sizes = [8, 32], strides = [1, 1]} : vector<8x64xf32> to vector<8x32xf32>
    %c40_62 = arith.constant 40 : index
    %c0_63 = arith.constant 0 : index
    %211 = vector.load %arg19[%c40_62, %c0_63] : memref<64x32xf32, #tpu.memory_space<vmem>>, vector<8x32xf32>
    tpu.vector_store %arg19[%c40_62, %c0_63], %210 {strides = array<i32>} : memref<64x32xf32, #tpu.memory_space<vmem>>, vector<8x32xf32>,
    %212 = vector.extract_strided_slice %209 {offsets = [0, 32], sizes = [8, 32], strides = [1, 1]} : vector<8x64xf32> to vector<8x32xf32>
    %c16_64 = arith.constant 16 : index
    %c0_65 = arith.constant 0 : index
    %213 = vector.load %arg20[%c16_64, %c0_65] : memref<64x32xf32, #tpu.memory_space<vmem>>, vector<8x32xf32>
    tpu.vector_store %arg20[%c16_64, %c0_65], %212 {strides = array<i32>} : memref<64x32xf32, #tpu.memory_space<vmem>>, vector<8x32xf32>,
    %c48_66 = arith.constant 48 : index
    %c0_67 = arith.constant 0 : index
    %214 = vector.load %arg18[%c48_66, %c0_67] : memref<64x192xf32, #tpu.memory_space<vmem>>, vector<8x192xf32>
    %cst_68 = arith.constant dense<0.000000e+00> : vector<8x192xf32>
    %215 = tpu.matmul %209, %7, %cst_68 {dimension_numbers = #tpu.dot_dimension_numbers<[1], [0], [0], [1], [0, 0, 1, 1], [], []>} : vector<8x64xf32>, vector<64x192xf32>, vector<8x192xf32> -> vector<8x192xf32>
    %216 = vector.broadcast %8 : vector<1x192xf32> to vector<8x192xf32>
    %217 = arith.addf %215, %216 : vector<8x192xf32>
    %218 = vector.extract_strided_slice %214 {offsets = [0, 0], sizes = [8, 64], strides = [1, 1]} : vector<8x192xf32> to vector<8x64xf32>
    %219 = vector.extract_strided_slice %217 {offsets = [0, 0], sizes = [8, 64], strides = [1, 1]} : vector<8x192xf32> to vector<8x64xf32>
    %220 = arith.addf %218, %219 : vector<8x64xf32>
    %221 = arith.negf %220 : vector<8x64xf32>
    %222 = math.exp %221 : vector<8x64xf32>
    %cst_69 = arith.constant 1.000000e+00 : f32
    %223 = vector.broadcast %cst_69 : f32 to vector<8x64xf32>
    %224 = arith.addf %223, %222 : vector<8x64xf32>
    %225 = arith.divf %223, %224 : vector<8x64xf32>
    %226 = vector.extract_strided_slice %214 {offsets = [0, 64], sizes = [8, 64], strides = [1, 1]} : vector<8x192xf32> to vector<8x64xf32>
    %227 = vector.extract_strided_slice %217 {offsets = [0, 64], sizes = [8, 64], strides = [1, 1]} : vector<8x192xf32> to vector<8x64xf32>
    %228 = arith.addf %226, %227 : vector<8x64xf32>
    %229 = arith.negf %228 : vector<8x64xf32>
    %230 = math.exp %229 : vector<8x64xf32>
    %cst_70 = arith.constant 1.000000e+00 : f32
    %231 = vector.broadcast %cst_70 : f32 to vector<8x64xf32>
    %232 = arith.addf %231, %230 : vector<8x64xf32>
    %233 = arith.divf %231, %232 : vector<8x64xf32>
    %234 = vector.extract_strided_slice %214 {offsets = [0, 128], sizes = [8, 64], strides = [1, 1]} : vector<8x192xf32> to vector<8x64xf32>
    %235 = vector.extract_strided_slice %217 {offsets = [0, 128], sizes = [8, 64], strides = [1, 1]} : vector<8x192xf32> to vector<8x64xf32>
    %236 = arith.mulf %225, %235 : vector<8x64xf32>
    %237 = arith.addf %234, %236 : vector<8x64xf32>
    %238 = math.tanh %237 : vector<8x64xf32>
    %cst_71 = arith.constant 1.000000e+00 : f32
    %239 = vector.broadcast %cst_71 : f32 to vector<8x64xf32>
    %240 = arith.subf %239, %233 : vector<8x64xf32>
    %241 = arith.mulf %240, %238 : vector<8x64xf32>
    %242 = arith.mulf %233, %209 : vector<8x64xf32>
    %243 = arith.addf %241, %242 : vector<8x64xf32>
    %244 = vector.extract_strided_slice %243 {offsets = [0, 0], sizes = [8, 32], strides = [1, 1]} : vector<8x64xf32> to vector<8x32xf32>
    %c48_72 = arith.constant 48 : index
    %c0_73 = arith.constant 0 : index
    %245 = vector.load %arg19[%c48_72, %c0_73] : memref<64x32xf32, #tpu.memory_space<vmem>>, vector<8x32xf32>
    tpu.vector_store %arg19[%c48_72, %c0_73], %244 {strides = array<i32>} : memref<64x32xf32, #tpu.memory_space<vmem>>, vector<8x32xf32>,
    %246 = vector.extract_strided_slice %243 {offsets = [0, 32], sizes = [8, 32], strides = [1, 1]} : vector<8x64xf32> to vector<8x32xf32>
    %c8_74 = arith.constant 8 : index
    %c0_75 = arith.constant 0 : index
    %247 = vector.load %arg20[%c8_74, %c0_75] : memref<64x32xf32, #tpu.memory_space<vmem>>, vector<8x32xf32>
    tpu.vector_store %arg20[%c8_74, %c0_75], %246 {strides = array<i32>} : memref<64x32xf32, #tpu.memory_space<vmem>>, vector<8x32xf32>,
    %c56_76 = arith.constant 56 : index
    %c0_77 = arith.constant 0 : index
    %248 = vector.load %arg18[%c56_76, %c0_77] : memref<64x192xf32, #tpu.memory_space<vmem>>, vector<8x192xf32>
    %cst_78 = arith.constant dense<0.000000e+00> : vector<8x192xf32>
    %249 = tpu.matmul %243, %7, %cst_78 {dimension_numbers = #tpu.dot_dimension_numbers<[1], [0], [0], [1], [0, 0, 1, 1], [], []>} : vector<8x64xf32>, vector<64x192xf32>, vector<8x192xf32> -> vector<8x192xf32>
    %250 = vector.broadcast %8 : vector<1x192xf32> to vector<8x192xf32>
    %251 = arith.addf %249, %250 : vector<8x192xf32>
    %252 = vector.extract_strided_slice %248 {offsets = [0, 0], sizes = [8, 64], strides = [1, 1]} : vector<8x192xf32> to vector<8x64xf32>
    %253 = vector.extract_strided_slice %251 {offsets = [0, 0], sizes = [8, 64], strides = [1, 1]} : vector<8x192xf32> to vector<8x64xf32>
    %254 = arith.addf %252, %253 : vector<8x64xf32>
    %255 = arith.negf %254 : vector<8x64xf32>
    %256 = math.exp %255 : vector<8x64xf32>
    %cst_79 = arith.constant 1.000000e+00 : f32
    %257 = vector.broadcast %cst_79 : f32 to vector<8x64xf32>
    %258 = arith.addf %257, %256 : vector<8x64xf32>
    %259 = arith.divf %257, %258 : vector<8x64xf32>
    %260 = vector.extract_strided_slice %248 {offsets = [0, 64], sizes = [8, 64], strides = [1, 1]} : vector<8x192xf32> to vector<8x64xf32>
    %261 = vector.extract_strided_slice %251 {offsets = [0, 64], sizes = [8, 64], strides = [1, 1]} : vector<8x192xf32> to vector<8x64xf32>
    %262 = arith.addf %260, %261 : vector<8x64xf32>
    %263 = arith.negf %262 : vector<8x64xf32>
    %264 = math.exp %263 : vector<8x64xf32>
    %cst_80 = arith.constant 1.000000e+00 : f32
    %265 = vector.broadcast %cst_80 : f32 to vector<8x64xf32>
    %266 = arith.addf %265, %264 : vector<8x64xf32>
    %267 = arith.divf %265, %266 : vector<8x64xf32>
    %268 = vector.extract_strided_slice %248 {offsets = [0, 128], sizes = [8, 64], strides = [1, 1]} : vector<8x192xf32> to vector<8x64xf32>
    %269 = vector.extract_strided_slice %251 {offsets = [0, 128], sizes = [8, 64], strides = [1, 1]} : vector<8x192xf32> to vector<8x64xf32>
    %270 = arith.mulf %259, %269 : vector<8x64xf32>
    %271 = arith.addf %268, %270 : vector<8x64xf32>
    %272 = math.tanh %271 : vector<8x64xf32>
    %cst_81 = arith.constant 1.000000e+00 : f32
    %273 = vector.broadcast %cst_81 : f32 to vector<8x64xf32>
    %274 = arith.subf %273, %267 : vector<8x64xf32>
    %275 = arith.mulf %274, %272 : vector<8x64xf32>
    %276 = arith.mulf %267, %243 : vector<8x64xf32>
    %277 = arith.addf %275, %276 : vector<8x64xf32>
    %278 = vector.extract_strided_slice %277 {offsets = [0, 0], sizes = [8, 32], strides = [1, 1]} : vector<8x64xf32> to vector<8x32xf32>
    %c56_82 = arith.constant 56 : index
    %c0_83 = arith.constant 0 : index
    %279 = vector.load %arg19[%c56_82, %c0_83] : memref<64x32xf32, #tpu.memory_space<vmem>>, vector<8x32xf32>
    tpu.vector_store %arg19[%c56_82, %c0_83], %278 {strides = array<i32>} : memref<64x32xf32, #tpu.memory_space<vmem>>, vector<8x32xf32>,
    %280 = vector.extract_strided_slice %277 {offsets = [0, 32], sizes = [8, 32], strides = [1, 1]} : vector<8x64xf32> to vector<8x32xf32>
    %c0_84 = arith.constant 0 : index
    %c0_85 = arith.constant 0 : index
    %281 = vector.load %arg20[%c0_84, %c0_85] : memref<64x32xf32, #tpu.memory_space<vmem>>, vector<8x32xf32>
    tpu.vector_store %arg20[%c0_84, %c0_85], %280 {strides = array<i32>} : memref<64x32xf32, #tpu.memory_space<vmem>>, vector<8x32xf32>,
    %282 = vector.extract_strided_slice %277 {offsets = [0, 0], sizes = [8, 32], strides = [1, 1]} : vector<8x64xf32> to vector<8x32xf32>
    %c0_86 = arith.constant 0 : index
    %c0_87 = arith.constant 0 : index
    %c0_88 = arith.constant 0 : index
    %283 = vector.load %arg16[%c0_86, %c0_87, %c0_88] : memref<2x8x32xf32, #tpu.memory_space<vmem>>, vector<1x8x32xf32>
    %284 = vector.shape_cast %283 : vector<1x8x32xf32> to vector<8x32xf32>
    %285 = vector.shape_cast %282 : vector<8x32xf32> to vector<1x8x32xf32>
    tpu.vector_store %arg16[%c0_86, %c0_87, %c0_88], %285 {strides = array<i32>} : memref<2x8x32xf32, #tpu.memory_space<vmem>>, vector<1x8x32xf32>,
    %286 = vector.extract_strided_slice %277 {offsets = [0, 32], sizes = [8, 32], strides = [1, 1]} : vector<8x64xf32> to vector<8x32xf32>
    %c1 = arith.constant 1 : index
    %c0_89 = arith.constant 0 : index
    %c0_90 = arith.constant 0 : index
    %287 = vector.load %arg16[%c1, %c0_89, %c0_90] : memref<2x8x32xf32, #tpu.memory_space<vmem>>, vector<1x8x32xf32>
    %288 = vector.shape_cast %287 : vector<1x8x32xf32> to vector<8x32xf32>
    %289 = vector.shape_cast %286 : vector<8x32xf32> to vector<1x8x32xf32>
    tpu.vector_store %arg16[%c1, %c0_89, %c0_90], %289 {strides = array<i32>} : memref<2x8x32xf32, #tpu.memory_space<vmem>>, vector<1x8x32xf32>,
    %c0_91 = arith.constant 0 : index
    %c0_92 = arith.constant 0 : index
    %290 = vector.load %arg19[%c0_91, %c0_92] : memref<64x32xf32, #tpu.memory_space<vmem>>, vector<64x32xf32>
    %c0_93 = arith.constant 0 : index
    %c0_94 = arith.constant 0 : index
    %291 = vector.load %arg20[%c0_93, %c0_94] : memref<64x32xf32, #tpu.memory_space<vmem>>, vector<64x32xf32>
    %c0_95 = arith.constant 0 : index
    %c0_96 = arith.constant 0 : index
    %292 = vector.load %arg7[%c0_95, %c0_96] : memref<32x64xf32, #tpu.memory_space<vmem>>, vector<32x64xf32>
    %cst_97 = arith.constant dense<0.000000e+00> : vector<64x64xf32>
    %293 = tpu.matmul %290, %292, %cst_97 {dimension_numbers = #tpu.dot_dimension_numbers<[1], [0], [0], [1], [0, 0, 1, 1], [], []>} : vector<64x32xf32>, vector<32x64xf32>, vector<64x64xf32> -> vector<64x64xf32>
    %c0_98 = arith.constant 0 : index
    %c0_99 = arith.constant 0 : index
    %294 = vector.load %arg8[%c0_98, %c0_99] : memref<32x64xf32, #tpu.memory_space<vmem>>, vector<32x64xf32>
    %cst_100 = arith.constant dense<0.000000e+00> : vector<64x64xf32>
    %295 = tpu.matmul %291, %294, %cst_100 {dimension_numbers = #tpu.dot_dimension_numbers<[1], [0], [0], [1], [0, 0, 1, 1], [], []>} : vector<64x32xf32>, vector<32x64xf32>, vector<64x64xf32> -> vector<64x64xf32>
    %296 = arith.addf %293, %295 : vector<64x64xf32>
    %c0_101 = arith.constant 0 : index
    %c0_102 = arith.constant 0 : index
    %297 = vector.load %arg9[%c0_101, %c0_102] : memref<1x64xf32, #tpu.memory_space<vmem>>, vector<1x64xf32>
    %298 = vector.broadcast %297 : vector<1x64xf32> to vector<64x64xf32>
    %299 = arith.addf %296, %298 : vector<64x64xf32>
    %300 = math.tanh %299 : vector<64x64xf32>
    %c0_103 = arith.constant 0 : index
    %c0_104 = arith.constant 0 : index
    %301 = vector.load %arg10[%c0_103, %c0_104] : memref<1x64xf32, #tpu.memory_space<vmem>>, vector<1x64xf32>
    %302 = vector.broadcast %301 : vector<1x64xf32> to vector<64x64xf32>
    %303 = arith.mulf %300, %302 : vector<64x64xf32>
    %cst_105 = arith.constant dense<0.000000e+00> : vector<64xf32>
    %304 = vector.multi_reduction <add>, %303, %cst_105 [1] : vector<64x64xf32> to vector<64xf32>
    %305 = vector.shape_cast %304 : vector<64xf32> to vector<64x1xf32>
    %306 = vector.shape_cast %305 : vector<64x1xf32> to vector<8x8x1xf32>
    %cst_106 = arith.constant dense<0xFF800000> : vector<8x1xf32>
    %307 = vector.multi_reduction <maximumf>, %306, %cst_106 [0] : vector<8x8x1xf32> to vector<8x1xf32>
    %308 = vector.shape_cast %307 : vector<8x1xf32> to vector<1x8x1xf32>
    %309 = vector.broadcast %308 : vector<1x8x1xf32> to vector<8x8x1xf32>
    %310 = arith.subf %306, %309 : vector<8x8x1xf32>
    %311 = math.exp %310 : vector<8x8x1xf32>
    %cst_107 = arith.constant dense<0.000000e+00> : vector<8x1xf32>
    %312 = vector.multi_reduction <add>, %311, %cst_107 [0] : vector<8x8x1xf32> to vector<8x1xf32>
    %313 = vector.shape_cast %312 : vector<8x1xf32> to vector<1x8x1xf32>
    %314 = vector.broadcast %313 : vector<1x8x1xf32> to vector<8x8x1xf32>
    %315 = arith.divf %311, %314 : vector<8x8x1xf32>
    %c0_108 = arith.constant 0 : index
    %c0_109 = arith.constant 0 : index
    %c0_110 = arith.constant 0 : index
    %316 = vector.load %arg17[%c0_108, %c0_109, %c0_110] : memref<8x8x1xf32, #tpu.memory_space<vmem>>, vector<8x8x1xf32>
    tpu.vector_store %arg17[%c0_108, %c0_109, %c0_110], %315 {strides = array<i32>} : memref<8x8x1xf32, #tpu.memory_space<vmem>>, vector<8x8x1xf32>,
    %317 = vector.shape_cast %315 : vector<8x8x1xf32> to vector<64x1xf32>
    %318 = vector.broadcast %317 : vector<64x1xf32> to vector<64x32xf32>
    %319 = arith.mulf %290, %318 : vector<64x32xf32>
    %320 = vector.shape_cast %319 : vector<64x32xf32> to vector<8x8x32xf32>
    %cst_111 = arith.constant dense<0.000000e+00> : vector<8x32xf32>
    %321 = vector.multi_reduction <add>, %320, %cst_111 [0] : vector<8x8x32xf32> to vector<8x32xf32>
    %322 = vector.broadcast %317 : vector<64x1xf32> to vector<64x32xf32>
    %323 = arith.mulf %291, %322 : vector<64x32xf32>
    %324 = vector.shape_cast %323 : vector<64x32xf32> to vector<8x8x32xf32>
    %cst_112 = arith.constant dense<0.000000e+00> : vector<8x32xf32>
    %325 = vector.multi_reduction <add>, %324, %cst_112 [0] : vector<8x8x32xf32> to vector<8x32xf32>
    %c0_113 = arith.constant 0 : index
    %c0_114 = arith.constant 0 : index
    %326 = vector.load %arg11[%c0_113, %c0_114] : memref<32x5xf32, #tpu.memory_space<vmem>>, vector<32x5xf32>
    %cst_115 = arith.constant dense<0.000000e+00> : vector<8x5xf32>
    %327 = tpu.matmul %321, %326, %cst_115 {dimension_numbers = #tpu.dot_dimension_numbers<[1], [0], [0], [1], [0, 0, 1, 1], [], []>} : vector<8x32xf32>, vector<32x5xf32>, vector<8x5xf32> -> vector<8x5xf32>
    %c0_116 = arith.constant 0 : index
    %c0_117 = arith.constant 0 : index
    %328 = vector.load %arg12[%c0_116, %c0_117] : memref<32x5xf32, #tpu.memory_space<vmem>>, vector<32x5xf32>
    %cst_118 = arith.constant dense<0.000000e+00> : vector<8x5xf32>
    %329 = tpu.matmul %325, %328, %cst_118 {dimension_numbers = #tpu.dot_dimension_numbers<[1], [0], [0], [1], [0, 0, 1, 1], [], []>} : vector<8x32xf32>, vector<32x5xf32>, vector<8x5xf32> -> vector<8x5xf32>
    %330 = arith.addf %327, %329 : vector<8x5xf32>
    %c0_119 = arith.constant 0 : index
    %c0_120 = arith.constant 0 : index
    %331 = vector.load %arg2[%c0_119, %c0_120] : memref<8x1xf32, #tpu.memory_space<vmem>>, vector<8x1xf32>
    %c0_121 = arith.constant 0 : index
    %c0_122 = arith.constant 0 : index
    %332 = vector.load %arg13[%c0_121, %c0_122] : memref<1x5xf32, #tpu.memory_space<vmem>>, vector<1x5xf32>
    %333 = vector.broadcast %331 : vector<8x1xf32> to vector<8x5xf32>
    %334 = vector.broadcast %332 : vector<1x5xf32> to vector<8x5xf32>
    %335 = arith.mulf %333, %334 : vector<8x5xf32>
    %336 = arith.addf %330, %335 : vector<8x5xf32>
    %c0_123 = arith.constant 0 : index
    %c0_124 = arith.constant 0 : index
    %337 = vector.load %arg14[%c0_123, %c0_124] : memref<1x5xf32, #tpu.memory_space<vmem>>, vector<1x5xf32>
    %338 = vector.broadcast %337 : vector<1x5xf32> to vector<8x5xf32>
    %339 = arith.addf %336, %338 : vector<8x5xf32>
    %cst_125 = arith.constant dense<0xFF800000> : vector<8xf32>
    %340 = vector.multi_reduction <maximumf>, %339, %cst_125 [1] : vector<8x5xf32> to vector<8xf32>
    %341 = vector.shape_cast %340 : vector<8xf32> to vector<8x1xf32>
    %342 = vector.broadcast %341 : vector<8x1xf32> to vector<8x5xf32>
    %343 = arith.subf %339, %342 : vector<8x5xf32>
    %344 = math.exp %343 : vector<8x5xf32>
    %cst_126 = arith.constant dense<0.000000e+00> : vector<8xf32>
    %345 = vector.multi_reduction <add>, %344, %cst_126 [1] : vector<8x5xf32> to vector<8xf32>
    %346 = vector.shape_cast %345 : vector<8xf32> to vector<8x1xf32>
    %347 = math.log %346 : vector<8x1xf32>
    %348 = arith.addf %347, %341 : vector<8x1xf32>
    %349 = vector.broadcast %348 : vector<8x1xf32> to vector<8x5xf32>
    %350 = arith.subf %339, %349 : vector<8x5xf32>
    %c0_127 = arith.constant 0 : index
    %c0_128 = arith.constant 0 : index
    %351 = vector.load %arg15[%c0_127, %c0_128] : memref<8x5xf32, #tpu.memory_space<vmem>>, vector<8x5xf32>
    tpu.vector_store %arg15[%c0_127, %c0_128], %350 {strides = array<i32>} : memref<8x5xf32, #tpu.memory_space<vmem>>, vector<8x5xf32>,
    return
  }
}

</mosaic_0001>

<llo_original>
// kernel: tpu_custom_call.1
$region0: #{tpu_custom_call.1}
  #allocation0 [shape = 'u32[]', space=smem, size = 0x4, offset = 0x4, fixed_abs, tag = 'smem constant byte address 0x4 - core index']
  #allocation1 [shape = 'u32[72,128]{1,0:T(1,128)}', space=vmem, size = 0x9000, scoped, tag = 'internal scratch']
  #allocation2 [shape = 'f32[64,192]{1,0:T(8,128)}', space=vmem, size = 0x10000, scoped, tag = 'scratch operand']
  #allocation3 [shape = 'f32[64,32]{1,0:T(8,128)}', space=vmem, size = 0x8000, scoped, tag = 'scratch operand']
  #allocation4 [shape = 'f32[64,32]{1,0:T(8,128)}', space=vmem, size = 0x8000, scoped, tag = 'scratch operand']
  %s0 = inlined_call_operand.vmem [shape: f32[64,128], index: 0, kind: input, shape index: {}]
  %s1 = inlined_call_operand.vmem [shape: f32[8,64], index: 1, kind: input, shape index: {}]
  %s2 = inlined_call_operand.vmem [shape: f32[8,1], index: 2, kind: input, shape index: {}]
  %s3 = inlined_call_operand.vmem [shape: f32[128,192], index: 3, kind: input, shape index: {}]
  %s4 = inlined_call_operand.vmem [shape: f32[1,192], index: 4, kind: input, shape index: {}]
  %s5 = inlined_call_operand.vmem [shape: f32[64,192], index: 5, kind: input, shape index: {}]
  %s6 = inlined_call_operand.vmem [shape: f32[1,192], index: 6, kind: input, shape index: {}]
  %s7 = inlined_call_operand.vmem [shape: f32[32,64], index: 7, kind: input, shape index: {}]
  %s8 = inlined_call_operand.vmem [shape: f32[32,64], index: 8, kind: input, shape index: {}]
  %s9 = inlined_call_operand.vmem [shape: f32[1,64], index: 9, kind: input, shape index: {}]
  %s10 = inlined_call_operand.vmem [shape: f32[1,64], index: 10, kind: input, shape index: {}]
  %s11 = inlined_call_operand.vmem [shape: f32[32,5], index: 11, kind: input, shape index: {}]
  %s12 = inlined_call_operand.vmem [shape: f32[32,5], index: 12, kind: input, shape index: {}]
  %s13 = inlined_call_operand.vmem [shape: f32[1,5], index: 13, kind: input, shape index: {}]
  %s14 = inlined_call_operand.vmem [shape: f32[1,5], index: 14, kind: input, shape index: {}]
  %s15 = inlined_call_operand.hbm [shape: f32[8,5], index: 15, kind: output, shape index: {0}]
  %s16 = inlined_call_operand.hbm [shape: f32[2,8,32], index: 16, kind: output, shape index: {1}]
  %s17 = inlined_call_operand.vmem [shape: f32[8,8,1], index: 17, kind: output, shape index: {2}]
  %18 = xla_tuple %s15, %s16, %s17
  %s19 = sld [smem:[#allocation0]]
  $region86: #{tpu_custom_call.1} parent=0
    _
  %s21 = ssub.s32 1, %s19
  %s22 = scalar_select 0, %s21, %s19
  $region1: #{tpu_custom_call.1} parent=0
    #allocation5 [shape = 'u8[4096]{0}', space=vmem, size = 0x1000, scoped, tag = 'output window, operand 0, single buffered']
    #allocation6 [shape = 's32[1]{0}', space=sflag, size = 0x4, scoped, tag = 'scoped memory for tpu_custom_call.1']
    #allocation7 [shape = 'u8[8192]{0}', space=vmem, size = 0x2000, scoped, tag = 'output window, operand 1, single buffered']
    #allocation8 [shape = 's32[1]{0}', space=sflag, size = 0x4, scoped, tag = 'scoped memory for tpu_custom_call.1']
    %23 = vsyncpa [#allocation6], 0
    %24 = vsyncpa [#allocation8], 0
    // Predicated region
    $region2: #{tpu_custom_call.1} parent=1 // pred_check
      _
    $region3: #{tpu_custom_call.1} parent=1 // pred_check_branch
      %26 = sbr.rel (0) target = $region5
    $region4: #{tpu_custom_call.1} parent=1 // pred_region
      _
    $region5: #{tpu_custom_call.1} parent=1 // pred_fallthru
      _
    // Predicated region
    $region6: #{tpu_custom_call.1} parent=1 // pred_check
      _
    $region7: #{tpu_custom_call.1} parent=1 // pred_check_branch
      %28 = sbr.rel (0) target = $region9
    $region8: #{tpu_custom_call.1} parent=1 // pred_region
      _
    $region9: #{tpu_custom_call.1} parent=1 // pred_fallthru
      _
    // Predicated region
    $region10: #{tpu_custom_call.1} parent=1 // pred_check
      _
    $region11: #{tpu_custom_call.1} parent=1 // pred_check_branch
      %30 = sbr.rel (0) target = $region13
    $region12: #{tpu_custom_call.1} parent=1 // pred_region
      _
    $region13: #{tpu_custom_call.1} parent=1 // pred_fallthru
      _
    // Predicated region
    $region14: #{tpu_custom_call.1} parent=1 // pred_check
      _
    $region15: #{tpu_custom_call.1} parent=1 // pred_check_branch
      %32 = sbr.rel (0) target = $region17
    $region16: #{tpu_custom_call.1} parent=1 // pred_region
      _
    $region17: #{tpu_custom_call.1} parent=1 // pred_fallthru
      _
    // Predicated region
    $region18: #{tpu_custom_call.1} parent=1 // pred_check
      _
    $region19: #{tpu_custom_call.1} parent=1 // pred_check_branch
      %34 = sbr.rel (0) target = $region21
    $region20: #{tpu_custom_call.1} parent=1 // pred_region
      _
    $region21: #{tpu_custom_call.1} parent=1 // pred_fallthru
      _
    // Predicated region
    $region22: #{tpu_custom_call.1} parent=1 // pred_check
      _
    $region23: #{tpu_custom_call.1} parent=1 // pred_check_branch
      %36 = sbr.rel (0) target = $region25
    $region24: #{tpu_custom_call.1} parent=1 // pred_region
      _
    $region25: #{tpu_custom_call.1} parent=1 // pred_fallthru
      _
    // Predicated region
    $region26: #{tpu_custom_call.1} parent=1 // pred_check
      _
    $region27: #{tpu_custom_call.1} parent=1 // pred_check_branch
      %38 = sbr.rel (0) target = $region29
    $region28: #{tpu_custom_call.1} parent=1 // pred_region
      _
    $region29: #{tpu_custom_call.1} parent=1 // pred_fallthru
      _
    // Predicated region
    $region30: #{tpu_custom_call.1} parent=1 // pred_check
      _
    $region31: #{tpu_custom_call.1} parent=1 // pred_check_branch
      %40 = sbr.rel (0) target = $region33
    $region32: #{tpu_custom_call.1} parent=1 // pred_region
      _
    $region33: #{tpu_custom_call.1} parent=1 // pred_fallthru
      _
    // Predicated region
    $region34: #{tpu_custom_call.1} parent=1 // pred_check
      _
    $region35: #{tpu_custom_call.1} parent=1 // pred_check_branch
      %42 = sbr.rel (0) target = $region37
    $region36: #{tpu_custom_call.1} parent=1 // pred_region
      _
    $region37: #{tpu_custom_call.1} parent=1 // pred_fallthru
      _
    // Predicated region
    $region38: #{tpu_custom_call.1} parent=1 // pred_check
      _
    $region39: #{tpu_custom_call.1} parent=1 // pred_check_branch
      %44 = sbr.rel (0) target = $region41
    $region40: #{tpu_custom_call.1} parent=1 // pred_region
      _
    $region41: #{tpu_custom_call.1} parent=1 // pred_fallthru
      _
    // Predicated region
    $region42: #{tpu_custom_call.1} parent=1 // pred_check
      _
    $region43: #{tpu_custom_call.1} parent=1 // pred_check_branch
      %46 = sbr.rel (0) target = $region45
    $region44: #{tpu_custom_call.1} parent=1 // pred_region
      _
    $region45: #{tpu_custom_call.1} parent=1 // pred_fallthru
      _
    // Predicated region
    $region46: #{tpu_custom_call.1} parent=1 // pred_check
      _
    $region47: #{tpu_custom_call.1} parent=1 // pred_check_branch
      %48 = sbr.rel (0) target = $region49
    $region48: #{tpu_custom_call.1} parent=1 // pred_region
      _
    $region49: #{tpu_custom_call.1} parent=1 // pred_fallthru
      _
    // Predicated region
    $region50: #{tpu_custom_call.1} parent=1 // pred_check
      _
    $region51: #{tpu_custom_call.1} parent=1 // pred_check_branch
      %50 = sbr.rel (0) target = $region53
    $region52: #{tpu_custom_call.1} parent=1 // pred_region
      _
    $region53: #{tpu_custom_call.1} parent=1 // pred_fallthru
      _
    // Predicated region
    $region54: #{tpu_custom_call.1} parent=1 // pred_check
      _
    $region55: #{tpu_custom_call.1} parent=1 // pred_check_branch
      %52 = sbr.rel (0) target = $region57
    $region56: #{tpu_custom_call.1} parent=1 // pred_region
      _
    $region57: #{tpu_custom_call.1} parent=1 // pred_fallthru
      _
    // Predicated region
    $region58: #{tpu_custom_call.1} parent=1 // pred_check
      _
    $region59: #{tpu_custom_call.1} parent=1 // pred_check_branch
      %54 = sbr.rel (0) target = $region61
    $region60: #{tpu_custom_call.1} parent=1 // pred_region
      _
    $region61: #{tpu_custom_call.1} parent=1 // pred_fallthru
      _
    %v55 = vld [vmem:[%s0] sm:$0xff]
    %v56 = vld [vmem:[%s0 + $0x8] sm:$0xff]
    %v57 = vld [vmem:[%s0 + $0x10] sm:$0xff]
    %v58 = vld [vmem:[%s0 + $0x18] sm:$0xff]
    %v59 = vld [vmem:[%s0 + $0x20] sm:$0xff]
    %v60 = vld [vmem:[%s0 + $0x28] sm:$0xff]
    %v61 = vld [vmem:[%s0 + $0x30] sm:$0xff]
    %v62 = vld [vmem:[%s0 + $0x38] sm:$0xff]
    %v63 = vld [vmem:[%s3] sm:$0xff]
    %v64 = vld [vmem:[%s3 + $0x8] sm:$0xff]
    %v65 = vld [vmem:[%s3 + $0x10] sm:$0xff]
    %v66 = vld [vmem:[%s3 + $0x18] sm:$0xff]
    %v67 = vld [vmem:[%s3 + $0x20] sm:$0xff]
    %v68 = vld [vmem:[%s3 + $0x28] sm:$0xff]
    %v69 = vld [vmem:[%s3 + $0x30] sm:$0xff]
    %v70 = vld [vmem:[%s3 + $0x38] sm:$0xff]
    %v71 = vld [vmem:[%s3 + $0x40] sm:$0xff]
    %v72 = vld [vmem:[%s3 + $0x48] sm:$0xff]
    %v73 = vld [vmem:[%s3 + $0x50] sm:$0xff]
    %v74 = vld [vmem:[%s3 + $0x58] sm:$0xff]
    %v75 = vld [vmem:[%s3 + $0x60] sm:$0xff]
    %v76 = vld [vmem:[%s3 + $0x68] sm:$0xff]
    %v77 = vld [vmem:[%s3 + $0x70] sm:$0xff]
    %v78 = vld [vmem:[%s3 + $0x78] sm:$0xff]
    %v79 = vld [vmem:[%s3 + $0x80] sm:$0xff]
    %v80 = vld [vmem:[%s3 + $0x88] sm:$0xff]
    %v81 = vld [vmem:[%s3 + $0x90] sm:$0xff]
    %v82 = vld [vmem:[%s3 + $0x98] sm:$0xff]
    %v83 = vld [vmem:[%s3 + $0xa0] sm:$0xff]
    %v84 = vld [vmem:[%s3 + $0xa8] sm:$0xff]
    %v85 = vld [vmem:[%s3 + $0xb0] sm:$0xff]
    %v86 = vld [vmem:[%s3 + $0xb8] sm:$0xff]
    %v87 = vld [vmem:[%s3 + $0xc0] sm:$0xff]
    %v88 = vld [vmem:[%s3 + $0xc8] sm:$0xff]
    %v89 = vld [vmem:[%s3 + $0xd0] sm:$0xff]
    %v90 = vld [vmem:[%s3 + $0xd8] sm:$0xff]
    %v91 = vld [vmem:[%s3 + $0xe0] sm:$0xff]
    %v92 = vld [vmem:[%s3 + $0xe8] sm:$0xff]
    %v93 = vld [vmem:[%s3 + $0xf0] sm:$0xff]
    %v94 = vld [vmem:[%s3 + $0xf8] sm:$0xff]
    %v95 = vld [vmem:[%s4] sm:$0x3]
    %v97 = vperm.slane %v95, 0
    %v98 = vperm.slane %v95, 1
    %101 = vmatpush.msra.mxu0 %v93
    %102 = vmatpush.msra.mxu0 %v91
    %103 = vmatpush.msra.mxu0 %v89
    %104 = vmatpush.msra.mxu0 %v87
    %105 = vmatpush.msra.mxu0 %v85
    %106 = vmatpush.msra.mxu0 %v83
    %107 = vmatpush.msra.mxu0 %v81
    %108 = vmatpush.msra.mxu0 %v79
    %109 = vmatpush.msra.mxu0 %v77
    %110 = vmatpush.msra.mxu0 %v75
    %111 = vmatpush.msra.mxu0 %v73
    %112 = vmatpush.msra.mxu0 %v71
    %113 = vmatpush.msra.mxu0 %v69
    %114 = vmatpush.msra.mxu0 %v67
    %115 = vmatpush.msra.mxu0 %v65
    %116 = vmatpush.msra.mxu0 %v63
    %117 = vmatmul.f32.gmra.mxu0 %v55
    %v118 = vpop.f32.mrf.mxu0
    %v119 = vadd.f32 %v97, %v118
    %120 = vmatmul.f32.gmra.mxu0 %v56
    %v121 = vpop.f32.mrf.mxu0
    %v122 = vadd.f32 %v97, %v121
    %123 = vmatmul.f32.gmra.mxu0 %v57
    %v124 = vpop.f32.mrf.mxu0
    %v125 = vadd.f32 %v97, %v124
    %126 = vmatmul.f32.gmra.mxu0 %v58
    %v127 = vpop.f32.mrf.mxu0
    %v128 = vadd.f32 %v97, %v127
    %129 = vmatmul.f32.gmra.mxu0 %v59
    %v130 = vpop.f32.mrf.mxu0
    %v131 = vadd.f32 %v97, %v130
    %132 = vmatmul.f32.gmra.mxu0 %v60
    %v133 = vpop.f32.mrf.mxu0
    %v134 = vadd.f32 %v97, %v133
    %135 = vmatmul.f32.gmra.mxu0 %v61
    %v136 = vpop.f32.mrf.mxu0
    %v137 = vadd.f32 %v97, %v136
    %138 = vmatmul.f32.gmra.mxu0 %v62
    %v139 = vpop.f32.mrf.mxu0
    %v140 = vadd.f32 %v97, %v139
    %141 = vdwg.mxu0
    %142 = vmatpush.msra.mxu0 %v94
    %143 = vmatpush.msra.mxu0 %v92
    %144 = vmatpush.msra.mxu0 %v90
    %145 = vmatpush.msra.mxu0 %v88
    %146 = vmatpush.msra.mxu0 %v86
    %147 = vmatpush.msra.mxu0 %v84
    %148 = vmatpush.msra.mxu0 %v82
    %149 = vmatpush.msra.mxu0 %v80
    %150 = vmatpush.msra.mxu0 %v78
    %151 = vmatpush.msra.mxu0 %v76
    %152 = vmatpush.msra.mxu0 %v74
    %153 = vmatpush.msra.mxu0 %v72
    %154 = vmatpush.msra.mxu0 %v70
    %155 = vmatpush.msra.mxu0 %v68
    %156 = vmatpush.msra.mxu0 %v66
    %157 = vmatpush.msra.mxu0 %v64
    %158 = vmatmul.f32.gmra.mxu0 %v55
    %v159 = vpop.f32.mrf.mxu0
    %v160 = vadd.f32 %v98, %v159
    %161 = vmatmul.f32.gmra.mxu0 %v56
    %v162 = vpop.f32.mrf.mxu0
    %v163 = vadd.f32 %v98, %v162
    %164 = vmatmul.f32.gmra.mxu0 %v57
    %v165 = vpop.f32.mrf.mxu0
    %v166 = vadd.f32 %v98, %v165
    %167 = vmatmul.f32.gmra.mxu0 %v58
    %v168 = vpop.f32.mrf.mxu0
    %v169 = vadd.f32 %v98, %v168
    %170 = vmatmul.f32.gmra.mxu0 %v59
    %v171 = vpop.f32.mrf.mxu0
    %v172 = vadd.f32 %v98, %v171
    %173 = vmatmul.f32.gmra.mxu0 %v60
    %v174 = vpop.f32.mrf.mxu0
    %v175 = vadd.f32 %v98, %v174
    %176 = vmatmul.f32.gmra.mxu0 %v61
    %v177 = vpop.f32.mrf.mxu0
    %v178 = vadd.f32 %v98, %v177
    %179 = vmatmul.f32.gmra.mxu0 %v62
    %v180 = vpop.f32.mrf.mxu0
    %v181 = vadd.f32 %v98, %v180
    %182 = vdwg.mxu0
    %183 = vst [vmem:[#allocation2] sm:$0xff] %v119
    %vm184 = vcmask 523264
    %185 = vst.msk [vmem:[#allocation2 + $0x8] sm:$0xff] %vm184, %v160
    %186 = vst [vmem:[#allocation2 + $0x10] sm:$0xff] %v122
    %187 = vst.msk [vmem:[#allocation2 + $0x18] sm:$0xff] %vm184, %v163
    %188 = vst [vmem:[#allocation2 + $0x20] sm:$0xff] %v125
    %189 = vst.msk [vmem:[#allocation2 + $0x28] sm:$0xff] %vm184, %v166
    %190 = vst [vmem:[#allocation2 + $0x30] sm:$0xff] %v128
    %191 = vst.msk [vmem:[#allocation2 + $0x38] sm:$0xff] %vm184, %v169
    %192 = vst [vmem:[#allocation2 + $0x40] sm:$0xff] %v131
    %193 = vst.msk [vmem:[#allocation2 + $0x48] sm:$0xff] %vm184, %v172
    %194 = vst [vmem:[#allocation2 + $0x50] sm:$0xff] %v134
    %195 = vst.msk [vmem:[#allocation2 + $0x58] sm:$0xff] %vm184, %v175
    %196 = vst [vmem:[#allocation2 + $0x60] sm:$0xff] %v137
    %197 = vst.msk [vmem:[#allocation2 + $0x68] sm:$0xff] %vm184, %v178
    %198 = vst [vmem:[#allocation2 + $0x70] sm:$0xff] %v140
    %199 = vst.msk [vmem:[#allocation2 + $0x78] sm:$0xff] %vm184, %v181
    %v200 = vld [vmem:[%s5] sm:$0xff]
    %v201 = vld [vmem:[%s5 + $0x8] sm:$0xff]
    %v202 = vld [vmem:[%s5 + $0x10] sm:$0xff]
    %v203 = vld [vmem:[%s5 + $0x18] sm:$0xff]
    %v204 = vld [vmem:[%s5 + $0x20] sm:$0xff]
    %v205 = vld [vmem:[%s5 + $0x28] sm:$0xff]
    %v206 = vld [vmem:[%s5 + $0x30] sm:$0xff]
    %v207 = vld [vmem:[%s5 + $0x38] sm:$0xff]
    %v208 = vld [vmem:[%s5 + $0x40] sm:$0xff]
    %v209 = vld [vmem:[%s5 + $0x48] sm:$0xff]
    %v210 = vld [vmem:[%s5 + $0x50] sm:$0xff]
    %v211 = vld [vmem:[%s5 + $0x58] sm:$0xff]
    %v212 = vld [vmem:[%s5 + $0x60] sm:$0xff]
    %v213 = vld [vmem:[%s5 + $0x68] sm:$0xff]
    %v214 = vld [vmem:[%s5 + $0x70] sm:$0xff]
    %v215 = vld [vmem:[%s5 + $0x78] sm:$0xff]
    %v216 = vld [vmem:[%s6] sm:$0x3]
    %v217 = vld [vmem:[%s1] sm:$0xff]
    %v218 = vld [vmem:[#allocation2] sm:$0xff]
    %v219 = vld [vmem:[#allocation2 + $0x8] sm:$0xff]
    %v221 = vperm.slane %v216, 0
    %v222 = vperm.slane %v216, 1
    %v226 = vsel %vm184, %v217, 0
    %228 = vmatpush.msra.mxu0 0.0
    %229 = vmatpush.msra.mxu0 0.0
    %230 = vmatpush.msra.mxu0 0.0
    %231 = vmatpush.msra.mxu0 0.0
    %232 = vmatpush.msra.mxu0 0.0
    %233 = vmatpush.msra.mxu0 0.0
    %234 = vmatpush.msra.mxu0 0.0
    %235 = vmatpush.msra.mxu0 0.0
    %236 = vmatpush.msra.mxu0 %v214
    %237 = vmatpush.msra.mxu0 %v212
    %238 = vmatpush.msra.mxu0 %v210
    %239 = vmatpush.msra.mxu0 %v208
    %240 = vmatpush.msra.mxu0 %v206
    %241 = vmatpush.msra.mxu0 %v204
    %242 = vmatpush.msra.mxu0 %v202
    %243 = vmatpush.msra.mxu0 %v200
    %244 = vmatmul.f32.gmra.mxu0 %v226
    %v245 = vpop.f32.mrf.mxu0
    %v246 = vadd.f32 %v221, %v245
    %247 = vdwg.mxu0
    %248 = vmatpush.msra.mxu0 0.0
    %249 = vmatpush.msra.mxu0 0.0
    %250 = vmatpush.msra.mxu0 0.0
    %251 = vmatpush.msra.mxu0 0.0
    %252 = vmatpush.msra.mxu0 0.0
    %253 = vmatpush.msra.mxu0 0.0
    %254 = vmatpush.msra.mxu0 0.0
    %255 = vmatpush.msra.mxu0 0.0
    %256 = vmatpush.msra.mxu0 %v215
    %257 = vmatpush.msra.mxu0 %v213
    %258 = vmatpush.msra.mxu0 %v211
    %259 = vmatpush.msra.mxu0 %v209
    %260 = vmatpush.msra.mxu0 %v207
    %261 = vmatpush.msra.mxu0 %v205
    %262 = vmatpush.msra.mxu0 %v203
    %263 = vmatpush.msra.mxu0 %v201
    %264 = vmatmul.f32.gmra.mxu0 %v226
    %v265 = vpop.f32.mrf.mxu0
    %v266 = vadd.f32 %v222, %v265
    %267 = vdwg.mxu0
    %v268 = vadd.f32 %v218, %v246
    %v269 = vxor.u32 %v268, 2147483648
    %v270 = vmul.f32 %v269, 1.442695
    %v271 = vpow.pop %v270
    %v272 = vadd.f32 %v271, 1.0
    %v273 = vrcp.pop %v272
    %v274 = vmul.f32 %v272, %v273
    %v275 = vsub.f32 1.0, %v274
    %v276 = vmul.f32 %v273, %v275
    %v277 = vadd.f32 %v273, %v276
    %vm278 = vweird.f32 %v272
    %vm279 = vweird.f32 %v273
    %vm280 = vmor %vm278, %vm279
    %v281 = vsel %vm280, %v273, %v277
    %v282 = vand.u32 2147483647, %v272
    %vm283 = vcmp.eq.f32.partialorder %v282, 8.507059e+37
    %v284 = vand.u32 %v272, 2147483648
    %v285 = vor.u32 1.1754944e-38, %v284
    %v286 = vsel %vm283, %v285, %v281
    %v287 = vmul.f32 1.0, %v286
    %v288 = vmul.f32 %v287, %v266
    %v289 = vadd.f32 %v219, %v288
    %v290 = vtanh.pop %v289
    %v291 = vsub.f32 1.0, %v287
    %293 = vrot.lane.b32.xlu0 %v290, 64
    %v294 = vpop.permute.xlu0 %293
    %v296 = vmul.f32 %v291, %v294
    %297 = vrot.lane.b32.xlu0 %v217, 64
    %v298 = vpop.permute.xlu0 %297
    %v300 = vmul.f32 %v287, %v298
    %v301 = vadd.f32 %v296, %v300
    %303 = vrot.lane.b32.xlu0 %v301, 64
    %v304 = vpop.permute.xlu0 %303
    %vm306 = vcmask 261120
    %307 = vst.msk [vmem:[#allocation3] sm:$0xff] %vm306, %v304
    %308 = vrot.lane.b32.xlu0 %v301, 32
    %v309 = vpop.permute.xlu0 %308
    %311 = vst.msk [vmem:[#allocation4 + $0x38] sm:$0xff] %vm306, %v309
    %v312 = vld [vmem:[#allocation2 + $0x10] sm:$0xff]
    %v313 = vld [vmem:[#allocation2 + $0x18] sm:$0xff]
    %v314 = vsel %vm184, %v304, 0
    %316 = vmatpush.msra.mxu0 0.0
    %317 = vmatpush.msra.mxu0 0.0
    %318 = vmatpush.msra.mxu0 0.0
    %319 = vmatpush.msra.mxu0 0.0
    %320 = vmatpush.msra.mxu0 0.0
    %321 = vmatpush.msra.mxu0 0.0
    %322 = vmatpush.msra.mxu0 0.0
    %323 = vmatpush.msra.mxu0 0.0
    %324 = vmatpush.msra.mxu0 %v214
    %325 = vmatpush.msra.mxu0 %v212
    %326 = vmatpush.msra.mxu0 %v210
    %327 = vmatpush.msra.mxu0 %v208
    %328 = vmatpush.msra.mxu0 %v206
    %329 = vmatpush.msra.mxu0 %v204
    %330 = vmatpush.msra.mxu0 %v202
    %331 = vmatpush.msra.mxu0 %v200
    %332 = vmatmul.f32.gmra.mxu0 %v314
    %v333 = vpop.f32.mrf.mxu0
    %v334 = vadd.f32 %v221, %v333
    %335 = vdwg.mxu0
    %336 = vmatpush.msra.mxu0 0.0
    %337 = vmatpush.msra.mxu0 0.0
    %338 = vmatpush.msra.mxu0 0.0
    %339 = vmatpush.msra.mxu0 0.0
    %340 = vmatpush.msra.mxu0 0.0
    %341 = vmatpush.msra.mxu0 0.0
    %342 = vmatpush.msra.mxu0 0.0
    %343 = vmatpush.msra.mxu0 0.0
    %344 = vmatpush.msra.mxu0 %v215
    %345 = vmatpush.msra.mxu0 %v213
    %346 = vmatpush.msra.mxu0 %v211
    %347 = vmatpush.msra.mxu0 %v209
    %348 = vmatpush.msra.mxu0 %v207
    %349 = vmatpush.msra.mxu0 %v205
    %350 = vmatpush.msra.mxu0 %v203
    %351 = vmatpush.msra.mxu0 %v201
    %352 = vmatmul.f32.gmra.mxu0 %v314
    %v353 = vpop.f32.mrf.mxu0
    %v354 = vadd.f32 %v222, %v353
    %355 = vdwg.mxu0
    %v356 = vadd.f32 %v312, %v334
    %v357 = vxor.u32 %v356, 2147483648
    %v358 = vmul.f32 %v357, 1.442695
    %v359 = vpow.pop %v358
    %v360 = vadd.f32 %v359, 1.0
    %v361 = vrcp.pop %v360
    %v362 = vmul.f32 %v360, %v361
    %v363 = vsub.f32 1.0, %v362
    %v364 = vmul.f32 %v361, %v363
    %v365 = vadd.f32 %v361, %v364
    %vm366 = vweird.f32 %v360
    %vm367 = vweird.f32 %v361
    %vm368 = vmor %vm366, %vm367
    %v369 = vsel %vm368, %v361, %v365
    %v370 = vand.u32 2147483647, %v360
    %vm371 = vcmp.eq.f32.partialorder %v370, 8.507059e+37
    %v372 = vand.u32 %v360, 2147483648
    %v373 = vor.u32 1.1754944e-38, %v372
    %v374 = vsel %vm371, %v373, %v369
    %v375 = vmul.f32 1.0, %v374
    %v376 = vmul.f32 %v375, %v354
    %v377 = vadd.f32 %v313, %v376
    %v378 = vtanh.pop %v377
    %v379 = vsub.f32 1.0, %v375
    %381 = vrot.lane.b32.xlu0 %v378, 64
    %v382 = vpop.permute.xlu0 %381
    %v384 = vmul.f32 %v379, %v382
    %v385 = vmul.f32 %v375, %v301
    %v386 = vadd.f32 %v384, %v385
    %388 = vrot.lane.b32.xlu0 %v386, 64
    %v389 = vpop.permute.xlu0 %388
    %391 = vst.msk [vmem:[#allocation3 + $0x8] sm:$0xff] %vm306, %v389
    %392 = vrot.lane.b32.xlu0 %v386, 32
    %v393 = vpop.permute.xlu0 %392
    %395 = vst.msk [vmem:[#allocation4 + $0x30] sm:$0xff] %vm306, %v393
    %v396 = vld [vmem:[#allocation2 + $0x20] sm:$0xff]
    %v397 = vld [vmem:[#allocation2 + $0x28] sm:$0xff]
    %v398 = vsel %vm184, %v389, 0
    %400 = vmatpush.msra.mxu0 0.0
    %401 = vmatpush.msra.mxu0 0.0
    %402 = vmatpush.msra.mxu0 0.0
    %403 = vmatpush.msra.mxu0 0.0
    %404 = vmatpush.msra.mxu0 0.0
    %405 = vmatpush.msra.mxu0 0.0
    %406 = vmatpush.msra.mxu0 0.0
    %407 = vmatpush.msra.mxu0 0.0
    %408 = vmatpush.msra.mxu0 %v214
    %409 = vmatpush.msra.mxu0 %v212
    %410 = vmatpush.msra.mxu0 %v210
    %411 = vmatpush.msra.mxu0 %v208
    %412 = vmatpush.msra.mxu0 %v206
    %413 = vmatpush.msra.mxu0 %v204
    %414 = vmatpush.msra.mxu0 %v202
    %415 = vmatpush.msra.mxu0 %v200
    %416 = vmatmul.f32.gmra.mxu0 %v398
    %v417 = vpop.f32.mrf.mxu0
    %v418 = vadd.f32 %v221, %v417
    %419 = vdwg.mxu0
    %420 = vmatpush.msra.mxu0 0.0
    %421 = vmatpush.msra.mxu0 0.0
    %422 = vmatpush.msra.mxu0 0.0
    %423 = vmatpush.msra.mxu0 0.0
    %424 = vmatpush.msra.mxu0 0.0
    %425 = vmatpush.msra.mxu0 0.0
    %426 = vmatpush.msra.mxu0 0.0
    %427 = vmatpush.msra.mxu0 0.0
    %428 = vmatpush.msra.mxu0 %v215
    %429 = vmatpush.msra.mxu0 %v213
    %430 = vmatpush.msra.mxu0 %v211
    %431 = vmatpush.msra.mxu0 %v209
    %432 = vmatpush.msra.mxu0 %v207
    %433 = vmatpush.msra.mxu0 %v205
    %434 = vmatpush.msra.mxu0 %v203
    %435 = vmatpush.msra.mxu0 %v201
    %436 = vmatmul.f32.gmra.mxu0 %v398
    %v437 = vpop.f32.mrf.mxu0
    %v438 = vadd.f32 %v222, %v437
    %439 = vdwg.mxu0
    %v440 = vadd.f32 %v396, %v418
    %v441 = vxor.u32 %v440, 2147483648
    %v442 = vmul.f32 %v441, 1.442695
    %v443 = vpow.pop %v442
    %v444 = vadd.f32 %v443, 1.0
    %v445 = vrcp.pop %v444
    %v446 = vmul.f32 %v444, %v445
    %v447 = vsub.f32 1.0, %v446
    %v448 = vmul.f32 %v445, %v447
    %v449 = vadd.f32 %v445, %v448
    %vm450 = vweird.f32 %v444
    %vm451 = vweird.f32 %v445
    %vm452 = vmor %vm450, %vm451
    %v453 = vsel %vm452, %v445, %v449
    %v454 = vand.u32 2147483647, %v444
    %vm455 = vcmp.eq.f32.partialorder %v454, 8.507059e+37
    %v456 = vand.u32 %v444, 2147483648
    %v457 = vor.u32 1.1754944e-38, %v456
    %v458 = vsel %vm455, %v457, %v453
    %v459 = vmul.f32 1.0, %v458
    %v460 = vmul.f32 %v459, %v438
    %v461 = vadd.f32 %v397, %v460
    %v462 = vtanh.pop %v461
    %v463 = vsub.f32 1.0, %v459
    %465 = vrot.lane.b32.xlu0 %v462, 64
    %v466 = vpop.permute.xlu0 %465
    %v468 = vmul.f32 %v463, %v466
    %v469 = vmul.f32 %v459, %v386
    %v470 = vadd.f32 %v468, %v469
    %472 = vrot.lane.b32.xlu0 %v470, 64
    %v473 = vpop.permute.xlu0 %472
    %475 = vst.msk [vmem:[#allocation3 + $0x10] sm:$0xff] %vm306, %v473
    %476 = vrot.lane.b32.xlu0 %v470, 32
    %v477 = vpop.permute.xlu0 %476
    %479 = vst.msk [vmem:[#allocation4 + $0x28] sm:$0xff] %vm306, %v477
    %v480 = vld [vmem:[#allocation2 + $0x30] sm:$0xff]
    %v481 = vld [vmem:[#allocation2 + $0x38] sm:$0xff]
    %v482 = vsel %vm184, %v473, 0
    %484 = vmatpush.msra.mxu0 0.0
    %485 = vmatpush.msra.mxu0 0.0
    %486 = vmatpush.msra.mxu0 0.0
    %487 = vmatpush.msra.mxu0 0.0
    %488 = vmatpush.msra.mxu0 0.0
    %489 = vmatpush.msra.mxu0 0.0
    %490 = vmatpush.msra.mxu0 0.0
    %491 = vmatpush.msra.mxu0 0.0
    %492 = vmatpush.msra.mxu0 %v214
    %493 = vmatpush.msra.mxu0 %v212
    %494 = vmatpush.msra.mxu0 %v210
    %495 = vmatpush.msra.mxu0 %v208
    %496 = vmatpush.msra.mxu0 %v206
    %497 = vmatpush.msra.mxu0 %v204
    %498 = vmatpush.msra.mxu0 %v202
    %499 = vmatpush.msra.mxu0 %v200
    %500 = vmatmul.f32.gmra.mxu0 %v482
    %v501 = vpop.f32.mrf.mxu0
    %v502 = vadd.f32 %v221, %v501
    %503 = vdwg.mxu0
    %504 = vmatpush.msra.mxu0 0.0
    %505 = vmatpush.msra.mxu0 0.0
    %506 = vmatpush.msra.mxu0 0.0
    %507 = vmatpush.msra.mxu0 0.0
    %508 = vmatpush.msra.mxu0 0.0
    %509 = vmatpush.msra.mxu0 0.0
    %510 = vmatpush.msra.mxu0 0.0
    %511 = vmatpush.msra.mxu0 0.0
    %512 = vmatpush.msra.mxu0 %v215
    %513 = vmatpush.msra.mxu0 %v213
    %514 = vmatpush.msra.mxu0 %v211
    %515 = vmatpush.msra.mxu0 %v209
    %516 = vmatpush.msra.mxu0 %v207
    %517 = vmatpush.msra.mxu0 %v205
    %518 = vmatpush.msra.mxu0 %v203
    %519 = vmatpush.msra.mxu0 %v201
    %520 = vmatmul.f32.gmra.mxu0 %v482
    %v521 = vpop.f32.mrf.mxu0
    %v522 = vadd.f32 %v222, %v521
    %523 = vdwg.mxu0
    %v524 = vadd.f32 %v480, %v502
    %v525 = vxor.u32 %v524, 2147483648
    %v526 = vmul.f32 %v525, 1.442695
    %v527 = vpow.pop %v526
    %v528 = vadd.f32 %v527, 1.0
    %v529 = vrcp.pop %v528
    %v530 = vmul.f32 %v528, %v529
    %v531 = vsub.f32 1.0, %v530
    %v532 = vmul.f32 %v529, %v531
    %v533 = vadd.f32 %v529, %v532
    %vm534 = vweird.f32 %v528
    %vm535 = vweird.f32 %v529
    %vm536 = vmor %vm534, %vm535
    %v537 = vsel %vm536, %v529, %v533
    %v538 = vand.u32 2147483647, %v528
    %vm539 = vcmp.eq.f32.partialorder %v538, 8.507059e+37
    %v540 = vand.u32 %v528, 2147483648
    %v541 = vor.u32 1.1754944e-38, %v540
    %v542 = vsel %vm539, %v541, %v537
    %v543 = vmul.f32 1.0, %v542
    %v544 = vmul.f32 %v543, %v522
    %v545 = vadd.f32 %v481, %v544
    %v546 = vtanh.pop %v545
    %v547 = vsub.f32 1.0, %v543
    %549 = vrot.lane.b32.xlu0 %v546, 64
    %v550 = vpop.permute.xlu0 %549
    %v552 = vmul.f32 %v547, %v550
    %v553 = vmul.f32 %v543, %v470
    %v554 = vadd.f32 %v552, %v553
    %556 = vrot.lane.b32.xlu0 %v554, 64
    %v557 = vpop.permute.xlu0 %556
    %559 = vst.msk [vmem:[#allocation3 + $0x18] sm:$0xff] %vm306, %v557
    %560 = vrot.lane.b32.xlu0 %v554, 32
    %v561 = vpop.permute.xlu0 %560
    %563 = vst.msk [vmem:[#allocation4 + $0x20] sm:$0xff] %vm306, %v561
    %v564 = vld [vmem:[#allocation2 + $0x40] sm:$0xff]
    %v565 = vld [vmem:[#allocation2 + $0x48] sm:$0xff]
    %v566 = vsel %vm184, %v557, 0
    %568 = vmatpush.msra.mxu0 0.0
    %569 = vmatpush.msra.mxu0 0.0
    %570 = vmatpush.msra.mxu0 0.0
    %571 = vmatpush.msra.mxu0 0.0
    %572 = vmatpush.msra.mxu0 0.0
    %573 = vmatpush.msra.mxu0 0.0
    %574 = vmatpush.msra.mxu0 0.0
    %575 = vmatpush.msra.mxu0 0.0
    %576 = vmatpush.msra.mxu0 %v214
    %577 = vmatpush.msra.mxu0 %v212
    %578 = vmatpush.msra.mxu0 %v210
    %579 = vmatpush.msra.mxu0 %v208
    %580 = vmatpush.msra.mxu0 %v206
    %581 = vmatpush.msra.mxu0 %v204
    %582 = vmatpush.msra.mxu0 %v202
    %583 = vmatpush.msra.mxu0 %v200
    %584 = vmatmul.f32.gmra.mxu0 %v566
    %v585 = vpop.f32.mrf.mxu0
    %v586 = vadd.f32 %v221, %v585
    %587 = vdwg.mxu0
    %588 = vmatpush.msra.mxu0 0.0
    %589 = vmatpush.msra.mxu0 0.0
    %590 = vmatpush.msra.mxu0 0.0
    %591 = vmatpush.msra.mxu0 0.0
    %592 = vmatpush.msra.mxu0 0.0
    %593 = vmatpush.msra.mxu0 0.0
    %594 = vmatpush.msra.mxu0 0.0
    %595 = vmatpush.msra.mxu0 0.0
    %596 = vmatpush.msra.mxu0 %v215
    %597 = vmatpush.msra.mxu0 %v213
    %598 = vmatpush.msra.mxu0 %v211
    %599 = vmatpush.msra.mxu0 %v209
    %600 = vmatpush.msra.mxu0 %v207
    %601 = vmatpush.msra.mxu0 %v205
    %602 = vmatpush.msra.mxu0 %v203
    %603 = vmatpush.msra.mxu0 %v201
    %604 = vmatmul.f32.gmra.mxu0 %v566
    %v605 = vpop.f32.mrf.mxu0
    %v606 = vadd.f32 %v222, %v605
    %607 = vdwg.mxu0
    %v608 = vadd.f32 %v564, %v586
    %v609 = vxor.u32 %v608, 2147483648
    %v610 = vmul.f32 %v609, 1.442695
    %v611 = vpow.pop %v610
    %v612 = vadd.f32 %v611, 1.0
    %v613 = vrcp.pop %v612
    %v614 = vmul.f32 %v612, %v613
    %v615 = vsub.f32 1.0, %v614
    %v616 = vmul.f32 %v613, %v615
    %v617 = vadd.f32 %v613, %v616
    %vm618 = vweird.f32 %v612
    %vm619 = vweird.f32 %v613
    %vm620 = vmor %vm618, %vm619
    %v621 = vsel %vm620, %v613, %v617
    %v622 = vand.u32 2147483647, %v612
    %vm623 = vcmp.eq.f32.partialorder %v622, 8.507059e+37
    %v624 = vand.u32 %v612, 2147483648
    %v625 = vor.u32 1.1754944e-38, %v624
    %v626 = vsel %vm623, %v625, %v621
    %v627 = vmul.f32 1.0, %v626
    %v628 = vmul.f32 %v627, %v606
    %v629 = vadd.f32 %v565, %v628
    %v630 = vtanh.pop %v629
    %v631 = vsub.f32 1.0, %v627
    %633 = vrot.lane.b32.xlu0 %v630, 64
    %v634 = vpop.permute.xlu0 %633
    %v636 = vmul.f32 %v631, %v634
    %v637 = vmul.f32 %v627, %v554
    %v638 = vadd.f32 %v636, %v637
    %640 = vrot.lane.b32.xlu0 %v638, 64
    %v641 = vpop.permute.xlu0 %640
    %643 = vst.msk [vmem:[#allocation3 + $0x20] sm:$0xff] %vm306, %v641
    %644 = vrot.lane.b32.xlu0 %v638, 32
    %v645 = vpop.permute.xlu0 %644
    %647 = vst.msk [vmem:[#allocation4 + $0x18] sm:$0xff] %vm306, %v645
    %v648 = vld [vmem:[#allocation2 + $0x50] sm:$0xff]
    %v649 = vld [vmem:[#allocation2 + $0x58] sm:$0xff]
    %v650 = vsel %vm184, %v641, 0
    %652 = vmatpush.msra.mxu0 0.0
    %653 = vmatpush.msra.mxu0 0.0
    %654 = vmatpush.msra.mxu0 0.0
    %655 = vmatpush.msra.mxu0 0.0
    %656 = vmatpush.msra.mxu0 0.0
    %657 = vmatpush.msra.mxu0 0.0
    %658 = vmatpush.msra.mxu0 0.0
    %659 = vmatpush.msra.mxu0 0.0
    %660 = vmatpush.msra.mxu0 %v214
    %661 = vmatpush.msra.mxu0 %v212
    %662 = vmatpush.msra.mxu0 %v210
    %663 = vmatpush.msra.mxu0 %v208
    %664 = vmatpush.msra.mxu0 %v206
    %665 = vmatpush.msra.mxu0 %v204
    %666 = vmatpush.msra.mxu0 %v202
    %667 = vmatpush.msra.mxu0 %v200
    %668 = vmatmul.f32.gmra.mxu0 %v650
    %v669 = vpop.f32.mrf.mxu0
    %v670 = vadd.f32 %v221, %v669
    %671 = vdwg.mxu0
    %672 = vmatpush.msra.mxu0 0.0
    %673 = vmatpush.msra.mxu0 0.0
    %674 = vmatpush.msra.mxu0 0.0
    %675 = vmatpush.msra.mxu0 0.0
    %676 = vmatpush.msra.mxu0 0.0
    %677 = vmatpush.msra.mxu0 0.0
    %678 = vmatpush.msra.mxu0 0.0
    %679 = vmatpush.msra.mxu0 0.0
    %680 = vmatpush.msra.mxu0 %v215
    %681 = vmatpush.msra.mxu0 %v213
    %682 = vmatpush.msra.mxu0 %v211
    %683 = vmatpush.msra.mxu0 %v209
    %684 = vmatpush.msra.mxu0 %v207
    %685 = vmatpush.msra.mxu0 %v205
    %686 = vmatpush.msra.mxu0 %v203
    %687 = vmatpush.msra.mxu0 %v201
    %688 = vmatmul.f32.gmra.mxu0 %v650
    %v689 = vpop.f32.mrf.mxu0
    %v690 = vadd.f32 %v222, %v689
    %691 = vdwg.mxu0
    %v692 = vadd.f32 %v648, %v670
    %v693 = vxor.u32 %v692, 2147483648
    %v694 = vmul.f32 %v693, 1.442695
    %v695 = vpow.pop %v694
    %v696 = vadd.f32 %v695, 1.0
    %v697 = vrcp.pop %v696
    %v698 = vmul.f32 %v696, %v697
    %v699 = vsub.f32 1.0, %v698
    %v700 = vmul.f32 %v697, %v699
    %v701 = vadd.f32 %v697, %v700
    %vm702 = vweird.f32 %v696
    %vm703 = vweird.f32 %v697
    %vm704 = vmor %vm702, %vm703
    %v705 = vsel %vm704, %v697, %v701
    %v706 = vand.u32 2147483647, %v696
    %vm707 = vcmp.eq.f32.partialorder %v706, 8.507059e+37
    %v708 = vand.u32 %v696, 2147483648
    %v709 = vor.u32 1.1754944e-38, %v708
    %v710 = vsel %vm707, %v709, %v705
    %v711 = vmul.f32 1.0, %v710
    %v712 = vmul.f32 %v711, %v690
    %v713 = vadd.f32 %v649, %v712
    %v714 = vtanh.pop %v713
    %v715 = vsub.f32 1.0, %v711
    %717 = vrot.lane.b32.xlu0 %v714, 64
    %v718 = vpop.permute.xlu0 %717
    %v720 = vmul.f32 %v715, %v718
    %v721 = vmul.f32 %v711, %v638
    %v722 = vadd.f32 %v720, %v721
    %724 = vrot.lane.b32.xlu0 %v722, 64
    %v725 = vpop.permute.xlu0 %724
    %727 = vst.msk [vmem:[#allocation3 + $0x28] sm:$0xff] %vm306, %v725
    %728 = vrot.lane.b32.xlu0 %v722, 32
    %v729 = vpop.permute.xlu0 %728
    %731 = vst.msk [vmem:[#allocation4 + $0x10] sm:$0xff] %vm306, %v729
    %v732 = vld [vmem:[#allocation2 + $0x60] sm:$0xff]
    %v733 = vld [vmem:[#allocation2 + $0x68] sm:$0xff]
    %v734 = vsel %vm184, %v725, 0
    %736 = vmatpush.msra.mxu0 0.0
    %737 = vmatpush.msra.mxu0 0.0
    %738 = vmatpush.msra.mxu0 0.0
    %739 = vmatpush.msra.mxu0 0.0
    %740 = vmatpush.msra.mxu0 0.0
    %741 = vmatpush.msra.mxu0 0.0
    %742 = vmatpush.msra.mxu0 0.0
    %743 = vmatpush.msra.mxu0 0.0
    %744 = vmatpush.msra.mxu0 %v214
    %745 = vmatpush.msra.mxu0 %v212
    %746 = vmatpush.msra.mxu0 %v210
    %747 = vmatpush.msra.mxu0 %v208
    %748 = vmatpush.msra.mxu0 %v206
    %749 = vmatpush.msra.mxu0 %v204
    %750 = vmatpush.msra.mxu0 %v202
    %751 = vmatpush.msra.mxu0 %v200
    %752 = vmatmul.f32.gmra.mxu0 %v734
    %v753 = vpop.f32.mrf.mxu0
    %v754 = vadd.f32 %v221, %v753
    %755 = vdwg.mxu0
    %756 = vmatpush.msra.mxu0 0.0
    %757 = vmatpush.msra.mxu0 0.0
    %758 = vmatpush.msra.mxu0 0.0
    %759 = vmatpush.msra.mxu0 0.0
    %760 = vmatpush.msra.mxu0 0.0
    %761 = vmatpush.msra.mxu0 0.0
    %762 = vmatpush.msra.mxu0 0.0
    %763 = vmatpush.msra.mxu0 0.0
    %764 = vmatpush.msra.mxu0 %v215
    %765 = vmatpush.msra.mxu0 %v213
    %766 = vmatpush.msra.mxu0 %v211
    %767 = vmatpush.msra.mxu0 %v209
    %768 = vmatpush.msra.mxu0 %v207
    %769 = vmatpush.msra.mxu0 %v205
    %770 = vmatpush.msra.mxu0 %v203
    %771 = vmatpush.msra.mxu0 %v201
    %772 = vmatmul.f32.gmra.mxu0 %v734
    %v773 = vpop.f32.mrf.mxu0
    %v774 = vadd.f32 %v222, %v773
    %775 = vdwg.mxu0
    %v776 = vadd.f32 %v732, %v754
    %v777 = vxor.u32 %v776, 2147483648
    %v778 = vmul.f32 %v777, 1.442695
    %v779 = vpow.pop %v778
    %v780 = vadd.f32 %v779, 1.0
    %v781 = vrcp.pop %v780
    %v782 = vmul.f32 %v780, %v781
    %v783 = vsub.f32 1.0, %v782
    %v784 = vmul.f32 %v781, %v783
    %v785 = vadd.f32 %v781, %v784
    %vm786 = vweird.f32 %v780
    %vm787 = vweird.f32 %v781
    %vm788 = vmor %vm786, %vm787
    %v789 = vsel %vm788, %v781, %v785
    %v790 = vand.u32 2147483647, %v780
    %vm791 = vcmp.eq.f32.partialorder %v790, 8.507059e+37
    %v792 = vand.u32 %v780, 2147483648
    %v793 = vor.u32 1.1754944e-38, %v792
    %v794 = vsel %vm791, %v793, %v789
    %v795 = vmul.f32 1.0, %v794
    %v796 = vmul.f32 %v795, %v774
    %v797 = vadd.f32 %v733, %v796
    %v798 = vtanh.pop %v797
    %v799 = vsub.f32 1.0, %v795
    %801 = vrot.lane.b32.xlu0 %v798, 64
    %v802 = vpop.permute.xlu0 %801
    %v804 = vmul.f32 %v799, %v802
    %v805 = vmul.f32 %v795, %v722
    %v806 = vadd.f32 %v804, %v805
    %808 = vrot.lane.b32.xlu0 %v806, 64
    %v809 = vpop.permute.xlu0 %808
    %811 = vst.msk [vmem:[#allocation3 + $0x30] sm:$0xff] %vm306, %v809
    %812 = vrot.lane.b32.xlu0 %v806, 32
    %v813 = vpop.permute.xlu0 %812
    %815 = vst.msk [vmem:[#allocation4 + $0x8] sm:$0xff] %vm306, %v813
    %v816 = vld [vmem:[#allocation2 + $0x70] sm:$0xff]
    %v817 = vld [vmem:[#allocation2 + $0x78] sm:$0xff]
    %v818 = vsel %vm184, %v809, 0
    %820 = vmatpush.msra.mxu0 0.0
    %821 = vmatpush.msra.mxu0 0.0
    %822 = vmatpush.msra.mxu0 0.0
    %823 = vmatpush.msra.mxu0 0.0
    %824 = vmatpush.msra.mxu0 0.0
    %825 = vmatpush.msra.mxu0 0.0
    %826 = vmatpush.msra.mxu0 0.0
    %827 = vmatpush.msra.mxu0 0.0
    %828 = vmatpush.msra.mxu0 %v214
    %829 = vmatpush.msra.mxu0 %v212
    %830 = vmatpush.msra.mxu0 %v210
    %831 = vmatpush.msra.mxu0 %v208
    %832 = vmatpush.msra.mxu0 %v206
    %833 = vmatpush.msra.mxu0 %v204
    %834 = vmatpush.msra.mxu0 %v202
    %835 = vmatpush.msra.mxu0 %v200
    %836 = vmatmul.f32.gmra.mxu0 %v818
    %v837 = vpop.f32.mrf.mxu0
    %v838 = vadd.f32 %v221, %v837
    %839 = vdwg.mxu0
    %840 = vmatpush.msra.mxu0 0.0
    %841 = vmatpush.msra.mxu0 0.0
    %842 = vmatpush.msra.mxu0 0.0
    %843 = vmatpush.msra.mxu0 0.0
    %844 = vmatpush.msra.mxu0 0.0
    %845 = vmatpush.msra.mxu0 0.0
    %846 = vmatpush.msra.mxu0 0.0
    %847 = vmatpush.msra.mxu0 0.0
    %848 = vmatpush.msra.mxu0 %v215
    %849 = vmatpush.msra.mxu0 %v213
    %850 = vmatpush.msra.mxu0 %v211
    %851 = vmatpush.msra.mxu0 %v209
    %852 = vmatpush.msra.mxu0 %v207
    %853 = vmatpush.msra.mxu0 %v205
    %854 = vmatpush.msra.mxu0 %v203
    %855 = vmatpush.msra.mxu0 %v201
    %856 = vmatmul.f32.gmra.mxu0 %v818
    %v857 = vpop.f32.mrf.mxu0
    %v858 = vadd.f32 %v222, %v857
    %859 = vdwg.mxu0
    %v860 = vadd.f32 %v816, %v838
    %v861 = vxor.u32 %v860, 2147483648
    %v862 = vmul.f32 %v861, 1.442695
    %v863 = vpow.pop %v862
    %v864 = vadd.f32 %v863, 1.0
    %v865 = vrcp.pop %v864
    %v866 = vmul.f32 %v864, %v865
    %v867 = vsub.f32 1.0, %v866
    %v868 = vmul.f32 %v865, %v867
    %v869 = vadd.f32 %v865, %v868
    %vm870 = vweird.f32 %v864
    %vm871 = vweird.f32 %v865
    %vm872 = vmor %vm870, %vm871
    %v873 = vsel %vm872, %v865, %v869
    %v874 = vand.u32 2147483647, %v864
    %vm875 = vcmp.eq.f32.partialorder %v874, 8.507059e+37
    %v876 = vand.u32 %v864, 2147483648
    %v877 = vor.u32 1.1754944e-38, %v876
    %v878 = vsel %vm875, %v877, %v873
    %v879 = vmul.f32 1.0, %v878
    %v880 = vmul.f32 %v879, %v858
    %v881 = vadd.f32 %v817, %v880
    %v882 = vtanh.pop %v881
    %v883 = vsub.f32 1.0, %v879
    %885 = vrot.lane.b32.xlu0 %v882, 64
    %v886 = vpop.permute.xlu0 %885
    %v888 = vmul.f32 %v883, %v886
    %v889 = vmul.f32 %v879, %v806
    %v890 = vadd.f32 %v888, %v889
    %892 = vrot.lane.b32.xlu0 %v890, 64
    %v893 = vpop.permute.xlu0 %892
    %895 = vst.msk [vmem:[#allocation3 + $0x38] sm:$0xff] %vm306, %v893
    %896 = vrot.lane.b32.xlu0 %v890, 32
    %v897 = vpop.permute.xlu0 %896
    %899 = vst.msk [vmem:[#allocation4] sm:$0xff] %vm306, %v897
    %900 = vst.msk [vmem:[#allocation7] sm:$0xff] %vm306, %v893
    %s901 = scalar_lea.vmem [#allocation7], 8
    %902 = vst.msk [vmem:[%s901] sm:$0xff] %vm306, %v897
    %v903 = vld [vmem:[#allocation3] sm:$0xff]
    %v904 = vld [vmem:[#allocation3 + $0x8] sm:$0xff]
    %v905 = vld [vmem:[#allocation3 + $0x10] sm:$0xff]
    %v906 = vld [vmem:[#allocation3 + $0x18] sm:$0xff]
    %v907 = vld [vmem:[#allocation3 + $0x20] sm:$0xff]
    %v908 = vld [vmem:[#allocation3 + $0x28] sm:$0xff]
    %v909 = vld [vmem:[#allocation3 + $0x30] sm:$0xff]
    %v910 = vld [vmem:[#allocation3 + $0x38] sm:$0xff]
    %v911 = vld [vmem:[#allocation4] sm:$0xff]
    %v912 = vld [vmem:[#allocation4 + $0x8] sm:$0xff]
    %v913 = vld [vmem:[#allocation4 + $0x10] sm:$0xff]
    %v914 = vld [vmem:[#allocation4 + $0x18] sm:$0xff]
    %v915 = vld [vmem:[#allocation4 + $0x20] sm:$0xff]
    %v916 = vld [vmem:[#allocation4 + $0x28] sm:$0xff]
    %v917 = vld [vmem:[#allocation4 + $0x30] sm:$0xff]
    %v918 = vld [vmem:[#allocation4 + $0x38] sm:$0xff]
    %v919 = vld [vmem:[%s7] sm:$0xff]
    %v920 = vld [vmem:[%s7 + $0x8] sm:$0xff]
    %v921 = vld [vmem:[%s7 + $0x10] sm:$0xff]
    %v922 = vld [vmem:[%s7 + $0x18] sm:$0xff]
    %v923 = vld [vmem:[%s8] sm:$0xff]
    %v924 = vld [vmem:[%s8 + $0x8] sm:$0xff]
    %v925 = vld [vmem:[%s8 + $0x10] sm:$0xff]
    %v926 = vld [vmem:[%s8 + $0x18] sm:$0xff]
    %v928 = vsel %vm306, %v911, 0
    %v931 = vsel %vm306, %v912, 0
    %v934 = vsel %vm306, %v913, 0
    %v937 = vsel %vm306, %v914, 0
    %v940 = vsel %vm306, %v915, 0
    %v943 = vsel %vm306, %v916, 0
    %v946 = vsel %vm306, %v917, 0
    %v949 = vsel %vm306, %v918, 0
    %951 = vmatpush.msra.mxu0 0.0
    %952 = vmatpush.msra.mxu0 0.0
    %953 = vmatpush.msra.mxu0 0.0
    %954 = vmatpush.msra.mxu0 0.0
    %955 = vmatpush.msra.mxu0 0.0
    %956 = vmatpush.msra.mxu0 0.0
    %957 = vmatpush.msra.mxu0 0.0
    %958 = vmatpush.msra.mxu0 0.0
    %959 = vmatpush.msra.mxu0 0.0
    %960 = vmatpush.msra.mxu0 0.0
    %961 = vmatpush.msra.mxu0 0.0
    %962 = vmatpush.msra.mxu0 0.0
    %963 = vmatpush.msra.mxu0 %v926
    %964 = vmatpush.msra.mxu0 %v925
    %965 = vmatpush.msra.mxu0 %v924
    %966 = vmatpush.msra.mxu0 %v923
    %967 = vmatmul.f32.gmra.mxu0 %v928
    %v968 = vpop.f32.mrf.mxu0
    %v969 = vadd.f32 0.0, %v968
    %970 = vmatmul.f32.gmra.mxu0 %v931
    %v971 = vpop.f32.mrf.mxu0
    %v972 = vadd.f32 0.0, %v971
    %973 = vmatmul.f32.gmra.mxu0 %v934
    %v974 = vpop.f32.mrf.mxu0
    %v975 = vadd.f32 0.0, %v974
    %976 = vmatmul.f32.gmra.mxu0 %v937
    %v977 = vpop.f32.mrf.mxu0
    %v978 = vadd.f32 0.0, %v977
    %979 = vmatmul.f32.gmra.mxu0 %v940
    %v980 = vpop.f32.mrf.mxu0
    %v981 = vadd.f32 0.0, %v980
    %982 = vmatmul.f32.gmra.mxu0 %v943
    %v983 = vpop.f32.mrf.mxu0
    %v984 = vadd.f32 0.0, %v983
    %985 = vmatmul.f32.gmra.mxu0 %v946
    %v986 = vpop.f32.mrf.mxu0
    %v987 = vadd.f32 0.0, %v986
    %988 = vmatmul.f32.gmra.mxu0 %v949
    %v989 = vpop.f32.mrf.mxu0
    %v990 = vadd.f32 0.0, %v989
    %991 = vdwg.mxu0
    %v993 = vsel %vm306, %v903, 0
    %v996 = vsel %vm306, %v904, 0
    %v999 = vsel %vm306, %v905, 0
    %v1002 = vsel %vm306, %v906, 0
    %v1005 = vsel %vm306, %v907, 0
    %v1008 = vsel %vm306, %v908, 0
    %v1011 = vsel %vm306, %v909, 0
    %v1014 = vsel %vm306, %v910, 0
    %1016 = vmatpush.msra.mxu0 0.0
    %1017 = vmatpush.msra.mxu0 0.0
    %1018 = vmatpush.msra.mxu0 0.0
    %1019 = vmatpush.msra.mxu0 0.0
    %1020 = vmatpush.msra.mxu0 0.0
    %1021 = vmatpush.msra.mxu0 0.0
    %1022 = vmatpush.msra.mxu0 0.0
    %1023 = vmatpush.msra.mxu0 0.0
    %1024 = vmatpush.msra.mxu0 0.0
    %1025 = vmatpush.msra.mxu0 0.0
    %1026 = vmatpush.msra.mxu0 0.0
    %1027 = vmatpush.msra.mxu0 0.0
    %1028 = vmatpush.msra.mxu0 %v922
    %1029 = vmatpush.msra.mxu0 %v921
    %1030 = vmatpush.msra.mxu0 %v920
    %1031 = vmatpush.msra.mxu0 %v919
    %1032 = vmatmul.f32.gmra.mxu0 %v993
    %v1033 = vpop.f32.mrf.mxu0
    %v1034 = vadd.f32 %v969, %v1033
    %1035 = vmatmul.f32.gmra.mxu0 %v996
    %v1036 = vpop.f32.mrf.mxu0
    %v1037 = vadd.f32 %v972, %v1036
    %1038 = vmatmul.f32.gmra.mxu0 %v999
    %v1039 = vpop.f32.mrf.mxu0
    %v1040 = vadd.f32 %v975, %v1039
    %1041 = vmatmul.f32.gmra.mxu0 %v1002
    %v1042 = vpop.f32.mrf.mxu0
    %v1043 = vadd.f32 %v978, %v1042
    %1044 = vmatmul.f32.gmra.mxu0 %v1005
    %v1045 = vpop.f32.mrf.mxu0
    %v1046 = vadd.f32 %v981, %v1045
    %1047 = vmatmul.f32.gmra.mxu0 %v1008
    %v1048 = vpop.f32.mrf.mxu0
    %v1049 = vadd.f32 %v984, %v1048
    %1050 = vmatmul.f32.gmra.mxu0 %v1011
    %v1051 = vpop.f32.mrf.mxu0
    %v1052 = vadd.f32 %v987, %v1051
    %1053 = vmatmul.f32.gmra.mxu0 %v1014
    %v1054 = vpop.f32.mrf.mxu0
    %v1055 = vadd.f32 %v990, %v1054
    %1056 = vdwg.mxu0
    %v1057 = vld [vmem:[%s9] sm:$0x1]
    %v1059 = vperm.slane %v1057, 0
    %v1061 = vadd.f32 %v1034, %v1059
    %v1062 = vadd.f32 %v1037, %v1059
    %v1063 = vadd.f32 %v1040, %v1059
    %v1064 = vadd.f32 %v1043, %v1059
    %v1065 = vadd.f32 %v1046, %v1059
    %v1066 = vadd.f32 %v1049, %v1059
    %v1067 = vadd.f32 %v1052, %v1059
    %v1068 = vadd.f32 %v1055, %v1059
    %v1069 = vtanh.pop %v1061
    %v1070 = vtanh.pop %v1062
    %v1071 = vtanh.pop %v1063
    %v1072 = vtanh.pop %v1064
    %v1073 = vtanh.pop %v1065
    %v1074 = vtanh.pop %v1066
    %v1075 = vtanh.pop %v1067
    %v1076 = vtanh.pop %v1068
    %v1077 = vld [vmem:[%s10] sm:$0x1]
    %v1079 = vperm.slane %v1077, 0
    %v1081 = vmul.f32 %v1069, %v1079
    %v1082 = vmul.f32 %v1070, %v1079
    %v1083 = vmul.f32 %v1071, %v1079
    %v1084 = vmul.f32 %v1072, %v1079
    %v1085 = vmul.f32 %v1073, %v1079
    %v1086 = vmul.f32 %v1074, %v1079
    %v1087 = vmul.f32 %v1075, %v1079
    %v1088 = vmul.f32 %v1076, %v1079
    %v1089 = vsel %vm184, %v1081, 0.0
    %1090 = vadd.xlane.f32.xlu0 %v1089
    %v1091 = vpop.xlane.xlu0 %1090
    %v1092 = vsel %vm184, %v1082, 0.0
    %1093 = vadd.xlane.f32.xlu0 %v1092
    %v1094 = vpop.xlane.xlu0 %1093
    %v1095 = vsel %vm184, %v1083, 0.0
    %1096 = vadd.xlane.f32.xlu0 %v1095
    %v1097 = vpop.xlane.xlu0 %1096
    %v1098 = vsel %vm184, %v1084, 0.0
    %1099 = vadd.xlane.f32.xlu0 %v1098
    %v1100 = vpop.xlane.xlu0 %1099
    %v1101 = vsel %vm184, %v1085, 0.0
    %1102 = vadd.xlane.f32.xlu0 %v1101
    %v1103 = vpop.xlane.xlu0 %1102
    %v1104 = vsel %vm184, %v1086, 0.0
    %1105 = vadd.xlane.f32.xlu0 %v1104
    %v1106 = vpop.xlane.xlu0 %1105
    %v1107 = vsel %vm184, %v1087, 0.0
    %1108 = vadd.xlane.f32.xlu0 %v1107
    %v1109 = vpop.xlane.xlu0 %1108
    %v1110 = vsel %vm184, %v1088, 0.0
    %1111 = vadd.xlane.f32.xlu0 %v1110
    %v1112 = vpop.xlane.xlu0 %1111
    %v1113 = vmax.f32 %v1091, %v1103
    %v1114 = vmax.f32 %v1094, %v1106
    %v1115 = vmax.f32 %v1097, %v1109
    %v1116 = vmax.f32 %v1100, %v1112
    %v1117 = vmax.f32 %v1113, %v1114
    %v1118 = vmax.f32 %v1115, %v1116
    %v1119 = vmax.f32 %v1117, %v1118
    %v1120 = vsub.f32 %v1091, %v1119
    %v1121 = vsub.f32 %v1094, %v1119
    %v1122 = vsub.f32 %v1097, %v1119
    %v1123 = vsub.f32 %v1100, %v1119
    %v1124 = vsub.f32 %v1103, %v1119
    %v1125 = vsub.f32 %v1106, %v1119
    %v1126 = vsub.f32 %v1109, %v1119
    %v1127 = vsub.f32 %v1112, %v1119
    %v1128 = vmul.f32 %v1120, 1.442695
    %v1129 = vpow.pop %v1128
    %v1130 = vmul.f32 %v1121, 1.442695
    %v1131 = vpow.pop %v1130
    %v1132 = vmul.f32 %v1122, 1.442695
    %v1133 = vpow.pop %v1132
    %v1134 = vmul.f32 %v1123, 1.442695
    %v1135 = vpow.pop %v1134
    %v1136 = vmul.f32 %v1124, 1.442695
    %v1137 = vpow.pop %v1136
    %v1138 = vmul.f32 %v1125, 1.442695
    %v1139 = vpow.pop %v1138
    %v1140 = vmul.f32 %v1126, 1.442695
    %v1141 = vpow.pop %v1140
    %v1142 = vmul.f32 %v1127, 1.442695
    %v1143 = vpow.pop %v1142
    %v1144 = vadd.f32 %v1129, %v1131
    %v1145 = vadd.f32 %v1144, %v1133
    %v1146 = vadd.f32 %v1145, %v1135
    %v1147 = vadd.f32 %v1146, %v1137
    %v1148 = vadd.f32 %v1147, %v1139
    %v1149 = vadd.f32 %v1148, %v1141
    %v1150 = vadd.f32 %v1149, %v1143
    %v1151 = vrcp.pop %v1150
    %v1152 = vmul.f32 %v1150, %v1151
    %v1153 = vsub.f32 1.0, %v1152
    %v1154 = vmul.f32 %v1151, %v1153
    %v1155 = vadd.f32 %v1151, %v1154
    %vm1156 = vweird.f32 %v1150
    %vm1157 = vweird.f32 %v1151
    %vm1158 = vmor %vm1156, %vm1157
    %v1159 = vsel %vm1158, %v1151, %v1155
    %v1160 = vand.u32 2147483647, %v1150
    %vm1161 = vcmp.eq.f32.partialorder %v1160, 8.507059e+37
    %v1162 = vand.u32 %v1150, 2147483648
    %v1163 = vor.u32 1.1754944e-38, %v1162
    %v1164 = vsel %vm1161, %v1163, %v1159
    %v1165 = vmul.f32 %v1129, %v1164
    %v1166 = vmul.f32 %v1131, %v1164
    %v1167 = vmul.f32 %v1133, %v1164
    %v1168 = vmul.f32 %v1135, %v1164
    %v1169 = vmul.f32 %v1137, %v1164
    %v1170 = vmul.f32 %v1139, %v1164
    %v1171 = vmul.f32 %v1141, %v1164
    %v1172 = vmul.f32 %v1143, %v1164
    %vm1173 = vcmask 7168
    %1174 = vst.msk [vmem:[%s17] sm:$0xff] %vm1173, %v1165
    %1175 = vst.msk [vmem:[%s17 + $0x8] sm:$0xff] %vm1173, %v1166
    %1176 = vst.msk [vmem:[%s17 + $0x10] sm:$0xff] %vm1173, %v1167
    %1177 = vst.msk [vmem:[%s17 + $0x18] sm:$0xff] %vm1173, %v1168
    %1178 = vst.msk [vmem:[%s17 + $0x20] sm:$0xff] %vm1173, %v1169
    %1179 = vst.msk [vmem:[%s17 + $0x28] sm:$0xff] %vm1173, %v1170
    %1180 = vst.msk [vmem:[%s17 + $0x30] sm:$0xff] %vm1173, %v1171
    %1181 = vst.msk [vmem:[%s17 + $0x38] sm:$0xff] %vm1173, %v1172
    %v1182 = vmul.f32 %v903, %v1165
    %v1183 = vmul.f32 %v904, %v1166
    %v1184 = vmul.f32 %v905, %v1167
    %v1185 = vmul.f32 %v906, %v1168
    %v1186 = vmul.f32 %v907, %v1169
    %v1187 = vmul.f32 %v908, %v1170
    %v1188 = vmul.f32 %v909, %v1171
    %v1189 = vmul.f32 %v910, %v1172
    %v1190 = vsel %vm306, %v1182, 0.0
    %v1191 = vsel %vm306, %v1183, 0.0
    %v1192 = vadd.f32 %v1190, %v1191
    %v1193 = vsel %vm306, %v1184, 0.0
    %v1194 = vadd.f32 %v1192, %v1193
    %v1195 = vsel %vm306, %v1185, 0.0
    %v1196 = vadd.f32 %v1194, %v1195
    %v1197 = vsel %vm306, %v1186, 0.0
    %v1198 = vadd.f32 %v1196, %v1197
    %v1199 = vsel %vm306, %v1187, 0.0
    %v1200 = vadd.f32 %v1198, %v1199
    %v1201 = vsel %vm306, %v1188, 0.0
    %v1202 = vadd.f32 %v1200, %v1201
    %v1203 = vsel %vm306, %v1189, 0.0
    %v1204 = vadd.f32 %v1202, %v1203
    %v1205 = vmul.f32 %v911, %v1165
    %v1206 = vmul.f32 %v912, %v1166
    %v1207 = vmul.f32 %v913, %v1167
    %v1208 = vmul.f32 %v914, %v1168
    %v1209 = vmul.f32 %v915, %v1169
    %v1210 = vmul.f32 %v916, %v1170
    %v1211 = vmul.f32 %v917, %v1171
    %v1212 = vmul.f32 %v918, %v1172
    %v1213 = vsel %vm306, %v1205, 0.0
    %v1214 = vsel %vm306, %v1206, 0.0
    %v1215 = vadd.f32 %v1213, %v1214
    %v1216 = vsel %vm306, %v1207, 0.0
    %v1217 = vadd.f32 %v1215, %v1216
    %v1218 = vsel %vm306, %v1208, 0.0
    %v1219 = vadd.f32 %v1217, %v1218
    %v1220 = vsel %vm306, %v1209, 0.0
    %v1221 = vadd.f32 %v1219, %v1220
    %v1222 = vsel %vm306, %v1210, 0.0
    %v1223 = vadd.f32 %v1221, %v1222
    %v1224 = vsel %vm306, %v1211, 0.0
    %v1225 = vadd.f32 %v1223, %v1224
    %v1226 = vsel %vm306, %v1212, 0.0
    %v1227 = vadd.f32 %v1225, %v1226
    %v1228 = vld [vmem:[%s11] sm:$0xff]
    %v1229 = vld [vmem:[%s11 + $0x8] sm:$0xff]
    %v1230 = vld [vmem:[%s11 + $0x10] sm:$0xff]
    %v1231 = vld [vmem:[%s11 + $0x18] sm:$0xff]
    %v1232 = vld [vmem:[%s12] sm:$0xff]
    %v1233 = vld [vmem:[%s12 + $0x8] sm:$0xff]
    %v1234 = vld [vmem:[%s12 + $0x10] sm:$0xff]
    %v1235 = vld [vmem:[%s12 + $0x18] sm:$0xff]
    %v1237 = vsel %vm306, %v1227, 0
    %1239 = vmatpush.msra.mxu0 0.0
    %1240 = vmatpush.msra.mxu0 0.0
    %1241 = vmatpush.msra.mxu0 0.0
    %1242 = vmatpush.msra.mxu0 0.0
    %1243 = vmatpush.msra.mxu0 0.0
    %1244 = vmatpush.msra.mxu0 0.0
    %1245 = vmatpush.msra.mxu0 0.0
    %1246 = vmatpush.msra.mxu0 0.0
    %1247 = vmatpush.msra.mxu0 0.0
    %1248 = vmatpush.msra.mxu0 0.0
    %1249 = vmatpush.msra.mxu0 0.0
    %1250 = vmatpush.msra.mxu0 0.0
    %1251 = vmatpush.msra.mxu0 %v1235
    %1252 = vmatpush.msra.mxu0 %v1234
    %1253 = vmatpush.msra.mxu0 %v1233
    %1254 = vmatpush.msra.mxu0 %v1232
    %1255 = vmatmul.f32.gmra.mxu0 %v1237
    %v1256 = vpop.f32.mrf.mxu0
    %v1257 = vadd.f32 0.0, %v1256
    %1258 = vdwg.mxu0
    %v1260 = vsel %vm306, %v1204, 0
    %1262 = vmatpush.msra.mxu0 0.0
    %1263 = vmatpush.msra.mxu0 0.0
    %1264 = vmatpush.msra.mxu0 0.0
    %1265 = vmatpush.msra.mxu0 0.0
    %1266 = vmatpush.msra.mxu0 0.0
    %1267 = vmatpush.msra.mxu0 0.0
    %1268 = vmatpush.msra.mxu0 0.0
    %1269 = vmatpush.msra.mxu0 0.0
    %1270 = vmatpush.msra.mxu0 0.0
    %1271 = vmatpush.msra.mxu0 0.0
    %1272 = vmatpush.msra.mxu0 0.0
    %1273 = vmatpush.msra.mxu0 0.0
    %1274 = vmatpush.msra.mxu0 %v1231
    %1275 = vmatpush.msra.mxu0 %v1230
    %1276 = vmatpush.msra.mxu0 %v1229
    %1277 = vmatpush.msra.mxu0 %v1228
    %1278 = vmatmul.f32.gmra.mxu0 %v1260
    %v1279 = vpop.f32.mrf.mxu0
    %v1280 = vadd.f32 %v1257, %v1279
    %1281 = vdwg.mxu0
    %v1282 = vld [vmem:[%s2] sm:$0xff]
    %v1283 = vld [vmem:[%s13] sm:$0x1]
    %1285 = vset.pattern.permute.xlu0 0
    %1286 = vperm.xlu0 %1285, %v1282
    %v1287 = vpop.permute.xlu0 %1286
    %v1290 = vperm.slane %v1283, 0
    %v1292 = vmul.f32 %v1287, %v1290
    %v1293 = vadd.f32 %v1280, %v1292
    %v1294 = vld [vmem:[%s14] sm:$0x1]
    %v1296 = vperm.slane %v1294, 0
    %v1298 = vadd.f32 %v1293, %v1296
    %vm1299 = vcmask 39936
    %v1300 = vsel %vm1299, %v1298, -inf
    %1301 = vmax.xlane.f32.xlu0 %v1300
    %v1302 = vpop.xlane.xlu0 %1301
    %v1303 = vsub.f32 %v1298, %v1302
    %v1304 = vmul.f32 %v1303, 1.442695
    %v1305 = vpow.pop %v1304
    %v1306 = vsel %vm1299, %v1305, 0.0
    %1307 = vadd.xlane.f32.xlu0 %v1306
    %v1308 = vpop.xlane.xlu0 %1307
    %v1309 = vlog2.pop %v1308
    %v1310 = vmul.f32 %v1309, 0.6931472
    %v1311 = vadd.f32 %v1310, %v1302
    %v1312 = vsub.f32 %v1298, %v1311
    %1313 = vst.msk [vmem:[#allocation5] sm:$0xff] %vm1299, %v1312
    // Predicated region
    $region62: #{tpu_custom_call.1} parent=1 // pred_check
      _
    $region63: #{tpu_custom_call.1} parent=1 // pred_check_branch
      %1315 = sbr.rel (0) target = $region65
    $region64: #{tpu_custom_call.1} parent=1 // pred_region
      %1317 = vsyncadd [#allocation6], 0
      %s1319 = sshll.u32 [#allocation5], 4
      %s1320 = int_to_ptr.vmem [resolvable:$true] %s1319
      %s1321 = sshll.u32 %s15, 4
      %s1322 = int_to_ptr.hbm [resolvable:$true] %s1321
      %1324 = dma.vmem_to_hbm [thread:$0]  %s1320, 128, %s1322, [#allocation6]
    $region65: #{tpu_custom_call.1} parent=1 // pred_fallthru
      _
    // Predicated region
    $region66: #{tpu_custom_call.1} parent=1 // pred_check
      _
    $region67: #{tpu_custom_call.1} parent=1 // pred_check_branch
      %1326 = sbr.rel (0) target = $region69
    $region68: #{tpu_custom_call.1} parent=1 // pred_region
      %1328 = vsyncadd [#allocation8], 0
      %s1329 = sshll.u32 [#allocation7], 4
      %s1330 = int_to_ptr.vmem [resolvable:$true] %s1329
      %s1331 = sshll.u32 %s16, 4
      %s1332 = int_to_ptr.hbm [resolvable:$true] %s1331
      %1337 = dma.vmem_to_hbm [thread:$0]  %s1330, 256, %s1332, [#allocation8], 128, 128, 8
    $region69: #{tpu_custom_call.1} parent=1 // pred_fallthru
      _
    // Predicated region
    $region70: #{tpu_custom_call.1} parent=1 // pred_check
      _
    $region71: #{tpu_custom_call.1} parent=1 // pred_check_branch
      %1339 = sbr.rel (0) target = $region73
    $region72: #{tpu_custom_call.1} parent=1 // pred_region
      _
    $region73: #{tpu_custom_call.1} parent=1 // pred_fallthru
      _
    // Predicated region
    $region74: #{tpu_custom_call.1} parent=1 // pred_check
      _
    $region75: #{tpu_custom_call.1} parent=1 // pred_check_branch
      %1341 = sbr.rel (0) target = $region77
    $region76: #{tpu_custom_call.1} parent=1 // pred_region
      %1343 = dma.done [#allocation6], 128
    $region77: #{tpu_custom_call.1} parent=1 // pred_fallthru
      _
    // Predicated region
    $region78: #{tpu_custom_call.1} parent=1 // pred_check
      _
    $region79: #{tpu_custom_call.1} parent=1 // pred_check_branch
      %1345 = sbr.rel (0) target = $region81
    $region80: #{tpu_custom_call.1} parent=1 // pred_region
      %1347 = dma.done [#allocation8], 256
    $region81: #{tpu_custom_call.1} parent=1 // pred_fallthru
      _
    // Predicated region
    $region82: #{tpu_custom_call.1} parent=1 // pred_check
      _
    $region83: #{tpu_custom_call.1} parent=1 // pred_check_branch
      %1349 = sbr.rel (0) target = $region85
    $region84: #{tpu_custom_call.1} parent=1 // pred_region
      _
    $region85: #{tpu_custom_call.1} parent=1 // pred_fallthru
      _
    %1350 = vsyncpa [#allocation6], 1
    %1351 = vsyncpa [#allocation8], 1

</llo_original>
